<compile_context>
chip_gen: v5e
topology: v5e:2x2
jax: 0.10.0
libtpu: 0.0.40
codegen_flags: <defaults>
</compile_context>

<pallas_src>
import functools
import math

import jax
import jax.numpy as jnp
import numpy as np
from jax.experimental import pallas as pl
from jax.experimental.pallas import tpu as pltpu

PAD_TOKEN_ID = 0


# --------------------------------------------------------------------------
# Kernel A: one pre-LN causal transformer block on packed rows.
#   x_ref:    (N, H)  f32   (N = B*T rows, residual stream stays f32)
#   mask_ref: (N, N)  f32   (1.0 = attendable: same-seq & causal & not-pad key)
#   weights:  bf16
#   out_ref:  (N, H)  f32
# --------------------------------------------------------------------------
def transformer_block_kernel(x_ref, mask_ref, wq_ref, wk_ref, wv_ref, wo_ref,
                             w1_ref, w2_ref, out_ref):
    x = x_ref[...]                       # (N, H) f32
    mask = mask_ref[...]                 # (N, N) f32
    H = x.shape[1]
    scale = 1.0 / math.sqrt(H)

    def layer_norm(h):                   # f32 math on VPU
        mu = jnp.mean(h, axis=-1, keepdims=True)
        var = jnp.mean((h - mu) ** 2, axis=-1, keepdims=True)
        return (h - mu) * jax.lax.rsqrt(var + 1e-5)

    xn = layer_norm(x).astype(jnp.bfloat16)
    q = jnp.dot(xn, wq_ref[...], preferred_element_type=jnp.float32)
    k = jnp.dot(xn, wk_ref[...], preferred_element_type=jnp.float32)
    v = jnp.dot(xn, wv_ref[...], preferred_element_type=jnp.float32)

    # q @ k^T without an explicit XLU transpose: contract dim 1 of both.
    scores = jax.lax.dot_general(
        q.astype(jnp.bfloat16), k.astype(jnp.bfloat16),
        dimension_numbers=(((1,), (1,)), ((), ())),
        preferred_element_type=jnp.float32) * scale          # (N, N) f32

    scores = jnp.where(mask > 0.5, scores, -1e9)
    scores = scores - jnp.max(scores, axis=-1, keepdims=True)
    p = jnp.exp(scores)
    p = p * pl.reciprocal(jnp.sum(p, axis=-1, keepdims=True), approx=True)
    ctx = jnp.dot(p.astype(jnp.bfloat16), v.astype(jnp.bfloat16),
                  preferred_element_type=jnp.float32)        # (N, H) f32

    h = x + jnp.dot(ctx.astype(jnp.bfloat16), wo_ref[...],
                    preferred_element_type=jnp.float32)
    hn = layer_norm(h).astype(jnp.bfloat16)
    m = jnp.dot(hn, w1_ref[...], preferred_element_type=jnp.float32)
    m = jax.nn.gelu(m, approximate=True).astype(jnp.bfloat16)
    h = h + jnp.dot(m, w2_ref[...], preferred_element_type=jnp.float32)
    out_ref[...] = h


def run_transformer_block(x2, mask_nn, params):
    N, H = x2.shape
    vmem = pl.BlockSpec(memory_space=pltpu.MemorySpace.VMEM)
    return pl.pallas_call(
        transformer_block_kernel,
        out_shape=jax.ShapeDtypeStruct((N, H), jnp.float32),
        in_specs=[vmem] * 8,
        out_specs=vmem,
    )(x2, mask_nn, params["wq"], params["wk"], params["wv"], params["wo"],
      params["w1"], params["w2"])


# --------------------------------------------------------------------------
# Kernel B: LM head + temperature scaling + online log-softmax + label gather
# + entropy, tiled over (row tiles, vocab tiles).  Vocab axis is a reduction
# ("arbitrary", innermost); row axis is "parallel" (shards across TCs on v7x).
#   h_ref:      (TR, H)   bf16
#   wlm_ref:    (H, TV)   bf16
#   labels_ref: (TR, 1)   int32
#   orig_ref:   (TR, TV)  f32   (unscaled logits tile -> (N, V) output)
#   stats_ref:  (TR, 128) f32   lane-dense: col0 = logprob, col1 = entropy
#   scratch:    m (running max), l (sum e^z), t (sum z e^z), lab (label logit)
# --------------------------------------------------------------------------
def lm_head_logprob_kernel(h_ref, wlm_ref, labels_ref, orig_ref, stats_ref,
                           m_sc, l_sc, t_sc, lab_sc, *, inv_temp, tv):
    v = pl.program_id(1)
    nv = pl.num_programs(1)

    @pl.when(v == 0)
    def _():
        m_sc[...] = jnp.full_like(m_sc, -jnp.inf)
        l_sc[...] = jnp.zeros_like(l_sc)
        t_sc[...] = jnp.zeros_like(t_sc)
        lab_sc[...] = jnp.zeros_like(lab_sc)

    orig = jnp.dot(h_ref[...], wlm_ref[...],
                   preferred_element_type=jnp.float32)       # (TR, TV) f32
    orig_ref[...] = orig

    z = orig * inv_temp                                      # temperature scale
    m_prev = m_sc[...]
    m_new = jnp.maximum(m_prev, jnp.max(z, axis=-1, keepdims=True))
    alpha = jnp.exp(m_prev - m_new)
    ez = jnp.exp(z - m_new)
    l_sc[...] = alpha * l_sc[...] + jnp.sum(ez, axis=-1, keepdims=True)
    t_sc[...] = alpha * t_sc[...] + jnp.sum(ez * z, axis=-1, keepdims=True)
    m_sc[...] = m_new

    # Label-logit gather restricted to this vocab tile.
    vid = jax.lax.broadcasted_iota(jnp.int32, z.shape, 1) + v * tv
    hit = vid == labels_ref[...]
    lab_sc[...] += jnp.sum(jnp.where(hit, z, 0.0), axis=-1, keepdims=True)

    @pl.when(v == nv - 1)
    def _():
        m = m_sc[...]
        l = l_sc[...]
        log_l = jnp.log(l)
        lp = lab_sc[...] - m - log_l                         # (TR, 1)
        ent = (m + log_l) - t_sc[...] / l                    # (TR, 1)
        lane = jax.lax.broadcasted_iota(jnp.int32, stats_ref.shape, 1)
        stats_ref[...] = jnp.where(lane == 0, lp,
                                   jnp.where(lane == 1, ent, 0.0))


def run_lm_head_logprobs(last_hidden, wlm_bf16, labels, inv_temp):
    B, R, H = last_hidden.shape
    V = wlm_bf16.shape[1]
    N = B * R
    TR = 8
    TV = 128 if V % 128 == 0 else V
    assert V % TV == 0
    n_pad = (-N) % TR
    Npad = N + n_pad

    h = last_hidden.reshape(N, H).astype(jnp.bfloat16)
    lab = labels.reshape(N, 1).astype(jnp.int32)
    if n_pad:
        h = jnp.pad(h, ((0, n_pad), (0, 0)))
        lab = jnp.pad(lab, ((0, n_pad), (0, 0)))

    NR, NV = Npad // TR, V // TV
    kernel = functools.partial(lm_head_logprob_kernel,
                               inv_temp=float(inv_temp), tv=TV)
    orig, stats = pl.pallas_call(
        kernel,
        out_shape=(jax.ShapeDtypeStruct((Npad, V), jnp.float32),
                   jax.ShapeDtypeStruct((Npad, 128), jnp.float32)),
        grid=(NR, NV),
        in_specs=[
            pl.BlockSpec((TR, H), lambda r, v: (r, 0)),
            pl.BlockSpec((H, TV), lambda r, v: (0, v)),
            pl.BlockSpec((TR, 1), lambda r, v: (r, 0)),
        ],
        out_specs=(
            pl.BlockSpec((TR, TV), lambda r, v: (r, v)),
            pl.BlockSpec((TR, 128), lambda r, v: (r, 0)),
        ),
        scratch_shapes=[pltpu.VMEM((TR, 1), jnp.float32)] * 4,
        compiler_params=pltpu.CompilerParams(
            dimension_semantics=("parallel", "arbitrary")),
    )(h, wlm_bf16, lab)

    original_logits = orig[:N].reshape(B, R, V)
    logprobs = stats[:N, 0].reshape(B, R)
    entropies = stats[:N, 1].reshape(B, R)
    return original_logits, logprobs, entropies


# --------------------------------------------------------------------------
# Policy.forward (AutoregressivePolicy semantics)
# --------------------------------------------------------------------------
def policy_forward(params, queries, query_attn_masks, responses, temperature=1.0):
    B, Q = queries.shape
    R = responses.shape[1]
    T = Q + R
    H = params["wte"].shape[1]

    input_ids = jnp.concatenate([queries, responses], axis=1)           # (B, T)
    attention_mask = (input_ids != PAD_TOKEN_ID)
    attention_mask = attention_mask.at[:, :Q].set(query_attn_masks.astype(bool))
    position_ids = jnp.maximum(
        jnp.cumsum(attention_mask.astype(jnp.int32), axis=-1) - 1, 0)

    # Embedding lookup (glue).
    x = params["wte"][input_ids] + params["wpe"][position_ids]          # (B,T,H) f32

    # Pack rows: (B*T, H); attention uses a block-diagonal causal mask.
    N = B * T
    x2 = x.reshape(N, H)
    pos = jnp.arange(N, dtype=jnp.int32)
    brow = pos // T
    prow = pos % T
    keym = attention_mask.reshape(N)
    allow = ((brow[:, None] == brow[None, :])
             & (prow[None, :] <= prow[:, None])
             & keym[None, :])
    mask_nn = allow.astype(jnp.float32)                                 # (N, N)

    hidden = run_transformer_block(x2, mask_nn, params).reshape(B, T, H)

    # outputs.logits[:, -R-1:-1] == lm_head(hidden[:, -R-1:-1]) (position-wise head)
    last_hidden_state = hidden[:, T - R - 1: T - 1]                     # (B, R, H)
    labels = input_ids[:, -R:]                                          # (B, R)

    inv_temp = 1.0 / float(temperature)
    original_logits, logprobs, entropies = run_lm_head_logprobs(
        last_hidden_state, params["wlm"], labels, inv_temp)
    # Temperature-scaled logits reconstructed with one scalar multiply
    # (kernel emits only one (N, V) tensor to halve store traffic).
    logits = original_logits * jnp.float32(inv_temp)

    return dict(
        original_logits=original_logits,
        logits=logits,
        logprobs=logprobs,
        entropies=entropies,
        last_hidden_state=last_hidden_state,
    )


def init_params(key, vocab, hidden, max_pos, mlp_mult=4, scale=0.02):
    ks = jax.random.split(key, 8)
    bf = jnp.bfloat16
    wte = jax.random.normal(ks[0], (vocab, hidden), jnp.float32) * scale
    return dict(
        wte=wte,
        wpe=jax.random.normal(ks[1], (max_pos, hidden), jnp.float32) * scale,
        wq=(jax.random.normal(ks[2], (hidden, hidden), jnp.float32) * scale).astype(bf),
        wk=(jax.random.normal(ks[3], (hidden, hidden), jnp.float32) * scale).astype(bf),
        wv=(jax.random.normal(ks[4], (hidden, hidden), jnp.float32) * scale).astype(bf),
        wo=(jax.random.normal(ks[5], (hidden, hidden), jnp.float32) * scale).astype(bf),
        w1=(jax.random.normal(ks[6], (hidden, mlp_mult * hidden), jnp.float32) * scale).astype(bf),
        w2=(jax.random.normal(ks[7], (mlp_mult * hidden, hidden), jnp.float32) * scale).astype(bf),
        wlm=wte.T.astype(bf),           # tied LM head: (hidden, vocab) bf16
    )


if __name__ == "__main__":
    V, H, MAXPOS = 512, 32, 64
    B, Q, R = 2, 5, 8
    TEMPERATURE = 0.7

    root = jax.random.PRNGKey(0)
    k_param, k_q, k_r = jax.random.split(root, 3)
    params = init_params(k_param, V, H, MAXPOS)

    queries = jax.random.randint(k_q, (B, Q), 1, V, dtype=jnp.int32)
    responses = jax.random.randint(k_r, (B, R), 1, V, dtype=jnp.int32)
    # row 1 is left-padded in the query portion.
    queries = queries.at[1, 0].set(PAD_TOKEN_ID)
    query_attn_masks = jnp.ones((B, Q), jnp.int32).at[1, 0].set(0)

    out = jax.jit(policy_forward, static_argnames=("temperature",))(
        params, queries, query_attn_masks, responses, temperature=TEMPERATURE)
    out = jax.block_until_ready(out)

    # ---- sanity checks -----------------------------------------------------
    assert out["original_logits"].shape == (B, R, V)
    assert out["logits"].shape == (B, R, V)
    assert out["logprobs"].shape == (B, R)
    assert out["entropies"].shape == (B, R)
    assert out["last_hidden_state"].shape == (B, R, H)

    logits_np = np.asarray(out["logits"], np.float64)
    labels_np = np.asarray(jnp.concatenate([queries, responses], axis=1)[:, -R:])
    lsm = logits_np - logits_np.max(-1, keepdims=True)
    lsm = lsm - np.log(np.exp(lsm).sum(-1, keepdims=True))
    ref_lp = np.take_along_axis(lsm, labels_np[..., None], axis=-1)[..., 0]
    ref_ent = -(np.exp(lsm) * lsm).sum(-1)

    np.testing.assert_allclose(np.asarray(out["logprobs"]), ref_lp, atol=1e-3, rtol=1e-3)
    np.testing.assert_allclose(np.asarray(out["entropies"]), ref_ent, atol=1e-3, rtol=1e-3)
    np.testing.assert_allclose(
        np.asarray(out["original_logits"]) / TEMPERATURE,
        np.asarray(out["logits"]), atol=1e-4, rtol=1e-4)
    assert np.all(np.isfinite(np.asarray(out["last_hidden_state"])))
    assert np.all(np.asarray(out["logprobs"]) <= 1e-5)
    assert np.all(np.asarray(out["entropies"]) >= -1e-5)

    print("KERNEL_OK")
</pallas_src>

<mosaic_0001>
module attributes {stable_mosaic.version = 11 : i64} {
  func.func @transformer_block_kernel(%arg0: memref<26x32xf32, #tpu.memory_space<vmem>>, %arg1: memref<26x26xf32, #tpu.memory_space<vmem>>, %arg2: memref<32x32xbf16, #tpu.memory_space<vmem>>, %arg3: memref<32x32xbf16, #tpu.memory_space<vmem>>, %arg4: memref<32x32xbf16, #tpu.memory_space<vmem>>, %arg5: memref<32x32xbf16, #tpu.memory_space<vmem>>, %arg6: memref<32x128xbf16, #tpu.memory_space<vmem>>, %arg7: memref<128x32xbf16, #tpu.memory_space<vmem>>, %arg8: memref<26x32xf32, #tpu.memory_space<vmem>>) attributes {dimension_semantics = [], scalar_prefetch = 0 : i64, scratch_operands = 0 : i64, tpu.core_type = #tpu.core_type<tc>} {
    %c0 = arith.constant 0 : index
    %c0_0 = arith.constant 0 : index
    %0 = vector.load %arg0[%c0, %c0_0] : memref<26x32xf32, #tpu.memory_space<vmem>>, vector<26x32xf32>
    %c0_1 = arith.constant 0 : index
    %c0_2 = arith.constant 0 : index
    %1 = vector.load %arg1[%c0_1, %c0_2] : memref<26x26xf32, #tpu.memory_space<vmem>>, vector<26x26xf32>
    %cst = arith.constant dense<0.000000e+00> : vector<26xf32>
    %2 = vector.multi_reduction <add>, %0, %cst [1] : vector<26x32xf32> to vector<26xf32>
    %3 = vector.shape_cast %2 : vector<26xf32> to vector<26x1xf32>
    %cst_3 = arith.constant 3.200000e+01 : f32
    %4 = vector.broadcast %cst_3 : f32 to vector<26x1xf32>
    %5 = arith.divf %3, %4 : vector<26x1xf32>
    %6 = vector.broadcast %5 : vector<26x1xf32> to vector<26x32xf32>
    %7 = arith.subf %0, %6 : vector<26x32xf32>
    %8 = arith.mulf %7, %7 : vector<26x32xf32>
    %cst_4 = arith.constant dense<0.000000e+00> : vector<26xf32>
    %9 = vector.multi_reduction <add>, %8, %cst_4 [1] : vector<26x32xf32> to vector<26xf32>
    %10 = vector.shape_cast %9 : vector<26xf32> to vector<26x1xf32>
    %cst_5 = arith.constant 3.200000e+01 : f32
    %11 = vector.broadcast %cst_5 : f32 to vector<26x1xf32>
    %12 = arith.divf %10, %11 : vector<26x1xf32>
    %13 = vector.broadcast %5 : vector<26x1xf32> to vector<26x32xf32>
    %14 = arith.subf %0, %13 : vector<26x32xf32>
    %cst_6 = arith.constant 9.99999974E-6 : f32
    %15 = vector.broadcast %cst_6 : f32 to vector<26x1xf32>
    %16 = arith.addf %12, %15 : vector<26x1xf32>
    %17 = math.rsqrt %16 : vector<26x1xf32>
    %18 = vector.broadcast %17 : vector<26x1xf32> to vector<26x32xf32>
    %19 = arith.mulf %14, %18 : vector<26x32xf32>
    %20 = arith.truncf %19 : vector<26x32xf32> to vector<26x32xbf16>
    %c0_7 = arith.constant 0 : index
    %c0_8 = arith.constant 0 : index
    %21 = vector.load %arg2[%c0_7, %c0_8] : memref<32x32xbf16, #tpu.memory_space<vmem>>, vector<32x32xbf16>
    %cst_9 = arith.constant dense<0.000000e+00> : vector<26x32xf32>
    %22 = tpu.matmul %20, %21, %cst_9 {dimension_numbers = #tpu.dot_dimension_numbers<[1], [0], [0], [1], [0, 0, 1, 1], [], []>} : vector<26x32xbf16>, vector<32x32xbf16>, vector<26x32xf32> -> vector<26x32xf32>
    %c0_10 = arith.constant 0 : index
    %c0_11 = arith.constant 0 : index
    %23 = vector.load %arg3[%c0_10, %c0_11] : memref<32x32xbf16, #tpu.memory_space<vmem>>, vector<32x32xbf16>
    %cst_12 = arith.constant dense<0.000000e+00> : vector<26x32xf32>
    %24 = tpu.matmul %20, %23, %cst_12 {dimension_numbers = #tpu.dot_dimension_numbers<[1], [0], [0], [1], [0, 0, 1, 1], [], []>} : vector<26x32xbf16>, vector<32x32xbf16>, vector<26x32xf32> -> vector<26x32xf32>
    %c0_13 = arith.constant 0 : index
    %c0_14 = arith.constant 0 : index
    %25 = vector.load %arg4[%c0_13, %c0_14] : memref<32x32xbf16, #tpu.memory_space<vmem>>, vector<32x32xbf16>
    %cst_15 = arith.constant dense<0.000000e+00> : vector<26x32xf32>
    %26 = tpu.matmul %20, %25, %cst_15 {dimension_numbers = #tpu.dot_dimension_numbers<[1], [0], [0], [1], [0, 0, 1, 1], [], []>} : vector<26x32xbf16>, vector<32x32xbf16>, vector<26x32xf32> -> vector<26x32xf32>
    %27 = arith.truncf %22 : vector<26x32xf32> to vector<26x32xbf16>
    %28 = arith.truncf %24 : vector<26x32xf32> to vector<26x32xbf16>
    %cst_16 = arith.constant dense<0.000000e+00> : vector<26x26xf32>
    %29 = tpu.matmul %27, %28, %cst_16 {dimension_numbers = #tpu.dot_dimension_numbers<[1], [1], [0], [0], [0, 0, 1, 0], [], []>} : vector<26x32xbf16>, vector<26x32xbf16>, vector<26x26xf32> -> vector<26x26xf32>
    %cst_17 = arith.constant 0.176776692 : f32
    %30 = vector.broadcast %cst_17 : f32 to vector<26x26xf32>
    %31 = arith.mulf %29, %30 : vector<26x26xf32>
    %cst_18 = arith.constant 5.000000e-01 : f32
    %32 = vector.broadcast %cst_18 : f32 to vector<26x26xf32>
    %33 = arith.cmpf ogt, %1, %32 : vector<26x26xf32>
    %cst_19 = arith.constant -1.000000e+09 : f32
    %34 = vector.broadcast %cst_19 : f32 to vector<26x26xf32>
    %35 = arith.select %33, %31, %34 : vector<26x26xi1>, vector<26x26xf32>
    %cst_20 = arith.constant dense<0xFF800000> : vector<26xf32>
    %36 = vector.multi_reduction <maximumf>, %35, %cst_20 [1] : vector<26x26xf32> to vector<26xf32>
    %37 = vector.shape_cast %36 : vector<26xf32> to vector<26x1xf32>
    %38 = vector.broadcast %37 : vector<26x1xf32> to vector<26x26xf32>
    %39 = arith.subf %35, %38 : vector<26x26xf32>
    %40 = math.exp %39 : vector<26x26xf32>
    %cst_21 = arith.constant dense<0.000000e+00> : vector<26xf32>
    %41 = vector.multi_reduction <add>, %40, %cst_21 [1] : vector<26x26xf32> to vector<26xf32>
    %42 = vector.shape_cast %41 : vector<26xf32> to vector<26x1xf32>
    %43 = tpu.reciprocal %42 {approx = true} : vector<26x1xf32> -> vector<26x1xf32>
    %44 = vector.broadcast %43 : vector<26x1xf32> to vector<26x26xf32>
    %45 = arith.mulf %40, %44 : vector<26x26xf32>
    %46 = arith.truncf %45 : vector<26x26xf32> to vector<26x26xbf16>
    %47 = arith.truncf %26 : vector<26x32xf32> to vector<26x32xbf16>
    %cst_22 = arith.constant dense<0.000000e+00> : vector<26x32xf32>
    %48 = tpu.matmul %46, %47, %cst_22 {dimension_numbers = #tpu.dot_dimension_numbers<[1], [0], [0], [1], [0, 0, 1, 1], [], []>} : vector<26x26xbf16>, vector<26x32xbf16>, vector<26x32xf32> -> vector<26x32xf32>
    %49 = arith.truncf %48 : vector<26x32xf32> to vector<26x32xbf16>
    %c0_23 = arith.constant 0 : index
    %c0_24 = arith.constant 0 : index
    %50 = vector.load %arg5[%c0_23, %c0_24] : memref<32x32xbf16, #tpu.memory_space<vmem>>, vector<32x32xbf16>
    %cst_25 = arith.constant dense<0.000000e+00> : vector<26x32xf32>
    %51 = tpu.matmul %49, %50, %cst_25 {dimension_numbers = #tpu.dot_dimension_numbers<[1], [0], [0], [1], [0, 0, 1, 1], [], []>} : vector<26x32xbf16>, vector<32x32xbf16>, vector<26x32xf32> -> vector<26x32xf32>
    %52 = arith.addf %0, %51 : vector<26x32xf32>
    %cst_26 = arith.constant dense<0.000000e+00> : vector<26xf32>
    %53 = vector.multi_reduction <add>, %52, %cst_26 [1] : vector<26x32xf32> to vector<26xf32>
    %54 = vector.shape_cast %53 : vector<26xf32> to vector<26x1xf32>
    %cst_27 = arith.constant 3.200000e+01 : f32
    %55 = vector.broadcast %cst_27 : f32 to vector<26x1xf32>
    %56 = arith.divf %54, %55 : vector<26x1xf32>
    %57 = vector.broadcast %56 : vector<26x1xf32> to vector<26x32xf32>
    %58 = arith.subf %52, %57 : vector<26x32xf32>
    %59 = arith.mulf %58, %58 : vector<26x32xf32>
    %cst_28 = arith.constant dense<0.000000e+00> : vector<26xf32>
    %60 = vector.multi_reduction <add>, %59, %cst_28 [1] : vector<26x32xf32> to vector<26xf32>
    %61 = vector.shape_cast %60 : vector<26xf32> to vector<26x1xf32>
    %cst_29 = arith.constant 3.200000e+01 : f32
    %62 = vector.broadcast %cst_29 : f32 to vector<26x1xf32>
    %63 = arith.divf %61, %62 : vector<26x1xf32>
    %64 = vector.broadcast %56 : vector<26x1xf32> to vector<26x32xf32>
    %65 = arith.subf %52, %64 : vector<26x32xf32>
    %cst_30 = arith.constant 9.99999974E-6 : f32
    %66 = vector.broadcast %cst_30 : f32 to vector<26x1xf32>
    %67 = arith.addf %63, %66 : vector<26x1xf32>
    %68 = math.rsqrt %67 : vector<26x1xf32>
    %69 = vector.broadcast %68 : vector<26x1xf32> to vector<26x32xf32>
    %70 = arith.mulf %65, %69 : vector<26x32xf32>
    %71 = arith.truncf %70 : vector<26x32xf32> to vector<26x32xbf16>
    %c0_31 = arith.constant 0 : index
    %c0_32 = arith.constant 0 : index
    %72 = vector.load %arg6[%c0_31, %c0_32] : memref<32x128xbf16, #tpu.memory_space<vmem>>, vector<32x128xbf16>
    %cst_33 = arith.constant dense<0.000000e+00> : vector<26x128xf32>
    %73 = tpu.matmul %71, %72, %cst_33 {dimension_numbers = #tpu.dot_dimension_numbers<[1], [0], [0], [1], [0, 0, 1, 1], [], []>} : vector<26x32xbf16>, vector<32x128xbf16>, vector<26x128xf32> -> vector<26x128xf32>
    %74 = arith.mulf %73, %73 : vector<26x128xf32>
    %75 = arith.mulf %73, %74 : vector<26x128xf32>
    %cst_34 = arith.constant 4.471500e-02 : f32
    %76 = vector.broadcast %cst_34 : f32 to vector<26x128xf32>
    %77 = arith.mulf %76, %75 : vector<26x128xf32>
    %78 = arith.addf %73, %77 : vector<26x128xf32>
    %cst_35 = arith.constant 0.797884583 : f32
    %79 = vector.broadcast %cst_35 : f32 to vector<26x128xf32>
    %80 = arith.mulf %79, %78 : vector<26x128xf32>
    %81 = math.tanh %80 : vector<26x128xf32>
    %cst_36 = arith.constant 1.000000e+00 : f32
    %82 = vector.broadcast %cst_36 : f32 to vector<26x128xf32>
    %83 = arith.addf %82, %81 : vector<26x128xf32>
    %cst_37 = arith.constant 5.000000e-01 : f32
    %84 = vector.broadcast %cst_37 : f32 to vector<26x128xf32>
    %85 = arith.mulf %84, %83 : vector<26x128xf32>
    %86 = arith.mulf %73, %85 : vector<26x128xf32>
    %87 = arith.truncf %86 : vector<26x128xf32> to vector<26x128xbf16>
    %c0_38 = arith.constant 0 : index
    %c0_39 = arith.constant 0 : index
    %88 = vector.load %arg7[%c0_38, %c0_39] : memref<128x32xbf16, #tpu.memory_space<vmem>>, vector<128x32xbf16>
    %cst_40 = arith.constant dense<0.000000e+00> : vector<26x32xf32>
    %89 = tpu.matmul %87, %88, %cst_40 {dimension_numbers = #tpu.dot_dimension_numbers<[1], [0], [0], [1], [0, 0, 1, 1], [], []>} : vector<26x128xbf16>, vector<128x32xbf16>, vector<26x32xf32> -> vector<26x32xf32>
    %90 = arith.addf %52, %89 : vector<26x32xf32>
    %c0_41 = arith.constant 0 : index
    %c0_42 = arith.constant 0 : index
    %91 = vector.load %arg8[%c0_41, %c0_42] : memref<26x32xf32, #tpu.memory_space<vmem>>, vector<26x32xf32>
    tpu.vector_store %arg8[%c0_41, %c0_42], %90 {strides = array<i32>} : memref<26x32xf32, #tpu.memory_space<vmem>>, vector<26x32xf32>,
    return
  }
}

module attributes {stable_mosaic.version = 11 : i64} {
  func.func @lm_head_logprob_kernel(%arg0: i32, %arg1: i32, %arg2: memref<8x32xbf16, #tpu.memory_space<vmem>>, %arg3: memref<32x128xbf16, #tpu.memory_space<vmem>>, %arg4: memref<8x1xi32, #tpu.memory_space<vmem>>, %arg5: memref<8x128xf32, #tpu.memory_space<vmem>>, %arg6: memref<8x128xf32, #tpu.memory_space<vmem>>, %arg7: memref<8x1xf32, #tpu.memory_space<vmem>>, %arg8: memref<8x1xf32, #tpu.memory_space<vmem>>, %arg9: memref<8x1xf32, #tpu.memory_space<vmem>>, %arg10: memref<8x1xf32, #tpu.memory_space<vmem>>) attributes {dimension_semantics = [#tpu.dimension_semantics<parallel>, #tpu.dimension_semantics<arbitrary>], iteration_bounds = array<i64: 2, 4>, scalar_prefetch = 0 : i64, scratch_operands = 4 : i64, tpu.core_type = #tpu.core_type<tc>, window_params = [{transform_indices = @transform_0, window_bounds = array<i64: 8, 32>}, {transform_indices = @transform_1, window_bounds = array<i64: 32, 128>}, {transform_indices = @transform_2, window_bounds = array<i64: 8, 1>}, {transform_indices = @transform_3, window_bounds = array<i64: 8, 128>}, {transform_indices = @transform_4, window_bounds = array<i64: 8, 128>}]} {
    %c0_i32 = arith.constant 0 : i32
    %0 = arith.cmpi eq, %arg1, %c0_i32 : i32
    %1 = arith.extui %0 : i1 to i32
    %c0_i32_0 = arith.constant 0 : i32
    %2 = arith.cmpi ne, %1, %c0_i32_0 : i32
    scf.if %2 {
      %cst_31 = arith.constant 0xFF800000 : f32
      %49 = vector.broadcast %cst_31 : f32 to vector<8x1xf32>
      %c0_32 = arith.constant 0 : index
      %c0_33 = arith.constant 0 : index
      %50 = vector.load %arg7[%c0_32, %c0_33] : memref<8x1xf32, #tpu.memory_space<vmem>>, vector<8x1xf32>
      tpu.vector_store %arg7[%c0_32, %c0_33], %49 {strides = array<i32>} : memref<8x1xf32, #tpu.memory_space<vmem>>, vector<8x1xf32>,
      %cst_34 = arith.constant 0.000000e+00 : f32
      %51 = vector.broadcast %cst_34 : f32 to vector<8x1xf32>
      %c0_35 = arith.constant 0 : index
      %c0_36 = arith.constant 0 : index
      %52 = vector.load %arg8[%c0_35, %c0_36] : memref<8x1xf32, #tpu.memory_space<vmem>>, vector<8x1xf32>
      tpu.vector_store %arg8[%c0_35, %c0_36], %51 {strides = array<i32>} : memref<8x1xf32, #tpu.memory_space<vmem>>, vector<8x1xf32>,
      %cst_37 = arith.constant 0.000000e+00 : f32
      %53 = vector.broadcast %cst_37 : f32 to vector<8x1xf32>
      %c0_38 = arith.constant 0 : index
      %c0_39 = arith.constant 0 : index
      %54 = vector.load %arg9[%c0_38, %c0_39] : memref<8x1xf32, #tpu.memory_space<vmem>>, vector<8x1xf32>
      tpu.vector_store %arg9[%c0_38, %c0_39], %53 {strides = array<i32>} : memref<8x1xf32, #tpu.memory_space<vmem>>, vector<8x1xf32>,
      %cst_40 = arith.constant 0.000000e+00 : f32
      %55 = vector.broadcast %cst_40 : f32 to vector<8x1xf32>
      %c0_41 = arith.constant 0 : index
      %c0_42 = arith.constant 0 : index
      %56 = vector.load %arg10[%c0_41, %c0_42] : memref<8x1xf32, #tpu.memory_space<vmem>>, vector<8x1xf32>
      tpu.vector_store %arg10[%c0_41, %c0_42], %55 {strides = array<i32>} : memref<8x1xf32, #tpu.memory_space<vmem>>, vector<8x1xf32>,
    } else {
    }
    %c0 = arith.constant 0 : index
    %c0_1 = arith.constant 0 : index
    %3 = vector.load %arg2[%c0, %c0_1] : memref<8x32xbf16, #tpu.memory_space<vmem>>, vector<8x32xbf16>
    %c0_2 = arith.constant 0 : index
    %c0_3 = arith.constant 0 : index
    %4 = vector.load %arg3[%c0_2, %c0_3] : memref<32x128xbf16, #tpu.memory_space<vmem>>, vector<32x128xbf16>
    %cst = arith.constant dense<0.000000e+00> : vector<8x128xf32>
    %5 = tpu.matmul %3, %4, %cst {dimension_numbers = #tpu.dot_dimension_numbers<[1], [0], [0], [1], [0, 0, 1, 1], [], []>} : vector<8x32xbf16>, vector<32x128xbf16>, vector<8x128xf32> -> vector<8x128xf32>
    %c0_4 = arith.constant 0 : index
    %c0_5 = arith.constant 0 : index
    %6 = vector.load %arg5[%c0_4, %c0_5] : memref<8x128xf32, #tpu.memory_space<vmem>>, vector<8x128xf32>
    tpu.vector_store %arg5[%c0_4, %c0_5], %5 {strides = array<i32>} : memref<8x128xf32, #tpu.memory_space<vmem>>, vector<8x128xf32>,
    %cst_6 = arith.constant 1.42857146 : f32
    %7 = vector.broadcast %cst_6 : f32 to vector<8x128xf32>
    %8 = arith.mulf %5, %7 : vector<8x128xf32>
    %c0_7 = arith.constant 0 : index
    %c0_8 = arith.constant 0 : index
    %9 = vector.load %arg7[%c0_7, %c0_8] : memref<8x1xf32, #tpu.memory_space<vmem>>, vector<8x1xf32>
    %cst_9 = arith.constant dense<0xFF800000> : vector<8xf32>
    %10 = vector.multi_reduction <maximumf>, %8, %cst_9 [1] : vector<8x128xf32> to vector<8xf32>
    %11 = vector.shape_cast %10 : vector<8xf32> to vector<8x1xf32>
    %12 = arith.maximumf %9, %11 : vector<8x1xf32>
    %13 = arith.subf %9, %12 : vector<8x1xf32>
    %14 = math.exp %13 : vector<8x1xf32>
    %15 = vector.broadcast %12 : vector<8x1xf32> to vector<8x128xf32>
    %16 = arith.subf %8, %15 : vector<8x128xf32>
    %17 = math.exp %16 : vector<8x128xf32>
    %c0_10 = arith.constant 0 : index
    %c0_11 = arith.constant 0 : index
    %18 = vector.load %arg8[%c0_10, %c0_11] : memref<8x1xf32, #tpu.memory_space<vmem>>, vector<8x1xf32>
    %19 = arith.mulf %14, %18 : vector<8x1xf32>
    %cst_12 = arith.constant dense<0.000000e+00> : vector<8xf32>
    %20 = vector.multi_reduction <add>, %17, %cst_12 [1] : vector<8x128xf32> to vector<8xf32>
    %21 = vector.shape_cast %20 : vector<8xf32> to vector<8x1xf32>
    %22 = arith.addf %19, %21 : vector<8x1xf32>
    %c0_13 = arith.constant 0 : index
    %c0_14 = arith.constant 0 : index
    %23 = vector.load %arg8[%c0_13, %c0_14] : memref<8x1xf32, #tpu.memory_space<vmem>>, vector<8x1xf32>
    tpu.vector_store %arg8[%c0_13, %c0_14], %22 {strides = array<i32>} : memref<8x1xf32, #tpu.memory_space<vmem>>, vector<8x1xf32>,
    %c0_15 = arith.constant 0 : index
    %c0_16 = arith.constant 0 : index
    %24 = vector.load %arg9[%c0_15, %c0_16] : memref<8x1xf32, #tpu.memory_space<vmem>>, vector<8x1xf32>
    %25 = arith.mulf %14, %24 : vector<8x1xf32>
    %26 = arith.mulf %17, %8 : vector<8x128xf32>
    %cst_17 = arith.constant dense<0.000000e+00> : vector<8xf32>
    %27 = vector.multi_reduction <add>, %26, %cst_17 [1] : vector<8x128xf32> to vector<8xf32>
    %28 = vector.shape_cast %27 : vector<8xf32> to vector<8x1xf32>
    %29 = arith.addf %25, %28 : vector<8x1xf32>
    %c0_18 = arith.constant 0 : index
    %c0_19 = arith.constant 0 : index
    %30 = vector.load %arg9[%c0_18, %c0_19] : memref<8x1xf32, #tpu.memory_space<vmem>>, vector<8x1xf32>
    tpu.vector_store %arg9[%c0_18, %c0_19], %29 {strides = array<i32>} : memref<8x1xf32, #tpu.memory_space<vmem>>, vector<8x1xf32>,
    %c0_20 = arith.constant 0 : index
    %c0_21 = arith.constant 0 : index
    %31 = vector.load %arg7[%c0_20, %c0_21] : memref<8x1xf32, #tpu.memory_space<vmem>>, vector<8x1xf32>
    tpu.vector_store %arg7[%c0_20, %c0_21], %12 {strides = array<i32>} : memref<8x1xf32, #tpu.memory_space<vmem>>, vector<8x1xf32>,
    %32 = tpu.iota {dimensions = array<i32: 1>} : vector<8x128xi32>
    %c128_i32 = arith.constant 128 : i32
    %33 = arith.muli %arg1, %c128_i32 : i32
    %34 = vector.broadcast %33 : i32 to vector<8x128xi32>
    %35 = arith.addi %32, %34 : vector<8x128xi32>
    %c0_22 = arith.constant 0 : index
    %c0_23 = arith.constant 0 : index
    %36 = vector.load %arg4[%c0_22, %c0_23] : memref<8x1xi32, #tpu.memory_space<vmem>>, vector<8x1xi32>
    %37 = vector.broadcast %36 : vector<8x1xi32> to vector<8x128xi32>
    %38 = arith.cmpi eq, %35, %37 : vector<8x128xi32>
    %c0_24 = arith.constant 0 : index
    %c0_25 = arith.constant 0 : index
    %39 = vector.load %arg10[%c0_24, %c0_25] : memref<8x1xf32, #tpu.memory_space<vmem>>, vector<8x1xf32>
    %cst_26 = arith.constant 0.000000e+00 : f32
    %40 = vector.broadcast %cst_26 : f32 to vector<8x128xf32>
    %41 = arith.select %38, %8, %40 : vector<8x128xi1>, vector<8x128xf32>
    %cst_27 = arith.constant dense<0.000000e+00> : vector<8xf32>
    %42 = vector.multi_reduction <add>, %41, %cst_27 [1] : vector<8x128xf32> to vector<8xf32>
    %43 = vector.shape_cast %42 : vector<8xf32> to vector<8x1xf32>
    %44 = arith.addf %39, %43 : vector<8x1xf32>
    %c0_28 = arith.constant 0 : index
    %c0_29 = arith.constant 0 : index
    %45 = vector.load %arg10[%c0_28, %c0_29] : memref<8x1xf32, #tpu.memory_space<vmem>>, vector<8x1xf32>
    tpu.vector_store %arg10[%c0_28, %c0_29], %44 {strides = array<i32>} : memref<8x1xf32, #tpu.memory_space<vmem>>, vector<8x1xf32>,
    %c3_i32 = arith.constant 3 : i32
    %46 = arith.cmpi eq, %arg1, %c3_i32 : i32
    %47 = arith.extui %46 : i1 to i32
    %c0_i32_30 = arith.constant 0 : i32
    %48 = arith.cmpi ne, %47, %c0_i32_30 : i32
    scf.if %48 {
      %c0_31 = arith.constant 0 : index
      %c0_32 = arith.constant 0 : index
      %49 = vector.load %arg7[%c0_31, %c0_32] : memref<8x1xf32, #tpu.memory_space<vmem>>, vector<8x1xf32>
      %c0_33 = arith.constant 0 : index
      %c0_34 = arith.constant 0 : index
      %50 = vector.load %arg8[%c0_33, %c0_34] : memref<8x1xf32, #tpu.memory_space<vmem>>, vector<8x1xf32>
      %51 = math.log %50 : vector<8x1xf32>
      %c0_35 = arith.constant 0 : index
      %c0_36 = arith.constant 0 : index
      %52 = vector.load %arg10[%c0_35, %c0_36] : memref<8x1xf32, #tpu.memory_space<vmem>>, vector<8x1xf32>
      %53 = arith.subf %52, %49 : vector<8x1xf32>
      %54 = arith.subf %53, %51 : vector<8x1xf32>
      %55 = arith.addf %49, %51 : vector<8x1xf32>
      %c0_37 = arith.constant 0 : index
      %c0_38 = arith.constant 0 : index
      %56 = vector.load %arg9[%c0_37, %c0_38] : memref<8x1xf32, #tpu.memory_space<vmem>>, vector<8x1xf32>
      %57 = arith.divf %56, %50 : vector<8x1xf32>
      %58 = arith.subf %55, %57 : vector<8x1xf32>
      %59 = tpu.iota {dimensions = array<i32: 1>} : vector<8x128xi32>
      %c0_i32_39 = arith.constant 0 : i32
      %60 = vector.broadcast %c0_i32_39 : i32 to vector<8x128xi32>
      %61 = arith.cmpi eq, %59, %60 : vector<8x128xi32>
      %c1_i32 = arith.constant 1 : i32
      %62 = vector.broadcast %c1_i32 : i32 to vector<8x128xi32>
      %63 = arith.cmpi eq, %59, %62 : vector<8x128xi32>
      %cst_40 = arith.constant 0.000000e+00 : f32
      %64 = vector.shape_cast %58 : vector<8x1xf32> to vector<8x1xf32>
      %65 = vector.broadcast %64 : vector<8x1xf32> to vector<8x128xf32>
      %66 = vector.broadcast %cst_40 : f32 to vector<8x128xf32>
      %67 = arith.select %63, %65, %66 : vector<8x128xi1>, vector<8x128xf32>
      %68 = vector.shape_cast %54 : vector<8x1xf32> to vector<8x1xf32>
      %69 = vector.broadcast %68 : vector<8x1xf32> to vector<8x128xf32>
      %70 = arith.select %61, %69, %67 : vector<8x128xi1>, vector<8x128xf32>
      %c0_41 = arith.constant 0 : index
      %c0_42 = arith.constant 0 : index
      %71 = vector.load %arg6[%c0_41, %c0_42] : memref<8x128xf32, #tpu.memory_space<vmem>>, vector<8x128xf32>
      tpu.vector_store %arg6[%c0_41, %c0_42], %70 {strides = array<i32>} : memref<8x128xf32, #tpu.memory_space<vmem>>, vector<8x128xf32>,
    } else {
    }
    return
  }
  func.func @transform_0(%arg0: i32, %arg1: i32) -> (i32, i32) {
    %c0_i32 = arith.constant 0 : i32
    %c0_i32_0 = arith.constant 0 : i32
    return %arg0, %c0_i32 : i32, i32
  }
  func.func @transform_1(%arg0: i32, %arg1: i32) -> (i32, i32) {
    %c0_i32 = arith.constant 0 : i32
    %c0_i32_0 = arith.constant 0 : i32
    return %c0_i32, %arg1 : i32, i32
  }
  func.func @transform_2(%arg0: i32, %arg1: i32) -> (i32, i32) {
    %c0_i32 = arith.constant 0 : i32
    %c0_i32_0 = arith.constant 0 : i32
    return %arg0, %c0_i32 : i32, i32
  }
  func.func @transform_3(%arg0: i32, %arg1: i32) -> (i32, i32) {
    %c0_i32 = arith.constant 0 : i32
    return %arg0, %arg1 : i32, i32
  }
  func.func @transform_4(%arg0: i32, %arg1: i32) -> (i32, i32) {
    %c0_i32 = arith.constant 0 : i32
    %c0_i32_0 = arith.constant 0 : i32
    return %arg0, %c0_i32 : i32, i32
  }
}

</mosaic_0001>

<llo_original>
// kernel: squeeze.3
$region0: #{squeeze.3}
  %s0 = inlined_call_operand.vmem [shape: f32[16], index: 0, kind: input, shape index: {}]
  %s1 = inlined_call_operand.hbm [shape: f32[2,8], index: 1, kind: output, shape index: {}]
  $region1: #{squeeze.3} parent=0
    #allocation0 [shape = 'u8[1024]{0}', space=vmem, size = 0x400, scoped, tag = 'operand span for operand 1']
    #allocation1 [shape = 's32[1]{0}', space=sflag, size = 0x4, scoped, tag = 'scoped memory for squeeze.3']
    #allocation2 [shape = 'u8[4096]{0}', space=vmem, size = 0x1000, scoped, tag = 'scoped mem for output reshape']
    #allocation3 [shape = 'u8[4096]{0}', space=vmem, size = 0x1000, scoped, tag = 'scoped mem for input reshape']
    %2 = vsyncpa [#allocation1], 0
    %s4 = ssub.s32 2, 1
    %v5 = vld [vmem:[%s0] sm:%s4]
    %6 = vst [vmem:[#allocation3] sm:%s4] %v5
    %v7 = vld [vmem:[#allocation3] sm:$0x1]
    %vm8 = vcmask 64512
    %9 = vst.msk [vmem:[#allocation2] sm:$0x1] %vm8, %v7
    %v10 = vld [vmem:[#allocation3] sm:$0x1]
    %11 = vrot.lane.b32.xlu0 %v10, 120
    %v12 = vpop.permute.xlu0 %11
    %vm13 = vcmask 64512
    %s14 = scalar_lea.vmem [#allocation2], 1
    %15 = vst.msk [vmem:[%s14] sm:$0x1] %vm13, %v12
    %s17 = ssub.s32 4, 1
    %v18 = vld [vmem:[#allocation2] sm:%s17]
    %s20 = ssub.s32 4, 1
    %21 = vst [vmem:[#allocation0] sm:%s20] %v18
    %23 = vsyncadd [#allocation1], 0
    %s25 = sshll.u32 [#allocation0], 4
    %s26 = int_to_ptr.vmem [resolvable:$true] %s25
    %s27 = sshll.u32 %s1, 4
    %s28 = int_to_ptr.hbm [resolvable:$true] %s27
    %30 = dma.vmem_to_hbm [thread:$0]  %s26, 32, %s28, [#allocation1]
    %32 = dma.done [#allocation1], 32
    %33 = vsyncpa [#allocation1], 1

// kernel: policy_forward.3
$region0: #{policy_forward.3}
  #allocation0 [shape = 'u32[]', space=smem, size = 0x4, offset = 0x4, fixed_abs, tag = 'smem constant byte address 0x4 - core index']
  #allocation1 [shape = 'u32[72,128]{1,0:T(1,128)}', space=vmem, size = 0x9000, scoped, tag = 'internal scratch']
  #allocation2 [shape = 'f32[8,1]{1,0:T(8,128)}', space=vmem, size = 0x1000, scoped, tag = 'scratch operand']
  #allocation3 [shape = 'f32[8,1]{1,0:T(8,128)}', space=vmem, size = 0x1000, scoped, tag = 'scratch operand']
  #allocation4 [shape = 'f32[8,1]{1,0:T(8,128)}', space=vmem, size = 0x1000, scoped, tag = 'scratch operand']
  #allocation5 [shape = 'f32[8,1]{1,0:T(8,128)}', space=vmem, size = 0x1000, scoped, tag = 'scratch operand']
  %s0 = inlined_call_operand.vmem [shape: bf16[16,32], index: 0, kind: input, shape index: {}]
  %s1 = inlined_call_operand.vmem [shape: bf16[32,512], index: 1, kind: input, shape index: {}]
  %s2 = inlined_call_operand.vmem [shape: s32[16,1], index: 2, kind: input, shape index: {}]
  %s3 = inlined_call_operand.vmem [shape: f32[16,512], index: 3, kind: output, shape index: {0}]
  %s4 = inlined_call_operand.vmem [shape: f32[16,128], index: 4, kind: output, shape index: {1}]
  %5 = xla_tuple %s3, %s4
  %s6 = sld [smem:[#allocation0]]
  $region102: #{policy_forward.3} parent=0
    _
  %s8 = ssub.s32 1, %s6
  %s9 = scalar_select 0, %s8, %s6
  $region1: #{policy_forward.3} parent=0
    #allocation6 [shape = 'u8[16384]{0}', space=vmem, size = 0x4000, scoped, tag = 'input window, operand 1']
    loop: start=0, step=1, limit=10
    $region2: #{policy_forward.3} parent=1 // loop_pre_header
      _
    $region3: #{policy_forward.3} parent=1 // loop_header
      %s11 = sphi 0, %s15
      %p12 = scmp.ge.s32.totalorder %s11, 10
      %s18 = sphi 0, %s30
      %s19 = sphi 0, %s26
      %s20 = sphi 0, %s18
      %s21 = sphi 0, %s19
      %s22 = sphi 0, %s20
      %s23 = sphi 0, %s21
      %s33 = sphi 0, %s35
      %s36 = sphi 0, %s33
      %s37 = sphi 0, %s36
      %s53 = sphi 0, %s37
      %s59 = sphi 0, %s61
      %s62 = sphi 0, %s59
      %s63 = sphi 0, %s62
      %s79 = sphi 0, %s63
      %s85 = sphi 0, %s87
      %s88 = sphi 0, %s85
      %s89 = sphi 0, %s88
      %s105 = sphi 0, %s89
      %s113 = sphi 0, %s115
      %s116 = sphi 0, %s113
      %s117 = sphi 0, %s116
      %s133 = sphi 0, %s117
      %s139 = sphi 0, %s141
      %s142 = sphi 0, %s139
      %s143 = sphi 0, %s142
      %s159 = sphi 0, %s143
    $region4: #{policy_forward.3} parent=1 // loop_header_branch
      %14 = sbr.rel (%p12) target = $region8
    $region5: #{policy_forward.3} parent=1 // loop_body
      %s16 = ssub.s32 %s11, 1
      %s17 = ssub.s32 %s11, 2
      %s24 = sadd.s32 1, %s19
      %p25 = scmp.ge.s32.totalorder %s24, 4
      %s26 = scalar_select %p25, 0, %s24
      %s27 = sadd.s32 1, %s18
      %s28 = scalar_select %p25, %s27, %s18
      %p29 = scmp.ge.s32.totalorder %s28, 2
      %s30 = scalar_select %p29, 0, %s28
      %s31 = ssub.s32 %s18, %s30
      %p32 = scmp.eq.s32.totalorder %s31, 0
      %s34 = sadd.s32 %s33, 1
      %s35 = scalar_select %p32, %s33, %s34
      %p38 = pneg %p32
      %p39 = scmp.eq.s32.totalorder %s11, 7
      %p40 = por %p38, %p39
      %p41 = scmp.ne.s32.totalorder %s33, %s36
      %p42 = scmp.eq.s32.totalorder %s11, 0
      %p43 = por %p41, %p42
      %p44 = scmp.ne.s32.totalorder %s33, %s36
      %p45 = scmp.eq.s32.totalorder %s16, 7
      %p46 = por %p44, %p45
      %p47 = scmp.ne.s32.totalorder %s36, %s37
      %p48 = scmp.eq.s32.totalorder %s16, 0
      %p49 = por %p47, %p48
      %p50 = scmp.ne.s32.totalorder %s36, %s37
      %p51 = scmp.eq.s32.totalorder %s17, 7
      %p52 = por %p50, %p51
      %p54 = scmp.ne.s32.totalorder %s37, %s53
      %p55 = scmp.eq.s32.totalorder %s17, 0
      %p56 = por %p54, %p55
      %s57 = ssub.s32 %s19, %s26
      %p58 = scmp.eq.s32.totalorder %s57, 0
      %s60 = sadd.s32 %s59, 1
      %s61 = scalar_select %p58, %s59, %s60
      %p64 = pneg %p58
      %p65 = scmp.eq.s32.totalorder %s11, 7
      %p66 = por %p64, %p65
      %p67 = scmp.ne.s32.totalorder %s59, %s62
      %p68 = scmp.eq.s32.totalorder %s11, 0
      %p69 = por %p67, %p68
      %p70 = scmp.ne.s32.totalorder %s59, %s62
      %p71 = scmp.eq.s32.totalorder %s16, 7
      %p72 = por %p70, %p71
      %p73 = scmp.ne.s32.totalorder %s62, %s63
      %p74 = scmp.eq.s32.totalorder %s16, 0
      %p75 = por %p73, %p74
      %p76 = scmp.ne.s32.totalorder %s62, %s63
      %p77 = scmp.eq.s32.totalorder %s17, 7
      %p78 = por %p76, %p77
      %p80 = scmp.ne.s32.totalorder %s63, %s79
      %p81 = scmp.eq.s32.totalorder %s17, 0
      %p82 = por %p80, %p81
      %s83 = ssub.s32 %s18, %s30
      %p84 = scmp.eq.s32.totalorder %s83, 0
      %s86 = sadd.s32 %s85, 1
      %s87 = scalar_select %p84, %s85, %s86
      %p90 = pneg %p84
      %p91 = scmp.eq.s32.totalorder %s11, 7
      %p92 = por %p90, %p91
      %p93 = scmp.ne.s32.totalorder %s85, %s88
      %p94 = scmp.eq.s32.totalorder %s11, 0
      %p95 = por %p93, %p94
      %p96 = scmp.ne.s32.totalorder %s85, %s88
      %p97 = scmp.eq.s32.totalorder %s16, 7
      %p98 = por %p96, %p97
      %p99 = scmp.ne.s32.totalorder %s88, %s89
      %p100 = scmp.eq.s32.totalorder %s16, 0
      %p101 = por %p99, %p100
      %p102 = scmp.ne.s32.totalorder %s88, %s89
      %p103 = scmp.eq.s32.totalorder %s17, 7
      %p104 = por %p102, %p103
      %p106 = scmp.ne.s32.totalorder %s89, %s105
      %p107 = scmp.eq.s32.totalorder %s17, 0
      %p108 = por %p106, %p107
      %s109 = ssub.s32 %s18, %s30
      %s110 = ssub.s32 %s19, %s26
      %s111 = sor.u32 %s109, %s110
      %p112 = scmp.eq.s32.totalorder %s111, 0
      %s114 = sadd.s32 %s113, 1
      %s115 = scalar_select %p112, %s113, %s114
      %p118 = pneg %p112
      %p119 = scmp.eq.s32.totalorder %s11, 7
      %p120 = por %p118, %p119
      %p121 = scmp.ne.s32.totalorder %s113, %s116
      %p122 = scmp.eq.s32.totalorder %s11, 0
      %p123 = por %p121, %p122
      %p124 = scmp.ne.s32.totalorder %s113, %s116
      %p125 = scmp.eq.s32.totalorder %s16, 7
      %p126 = por %p124, %p125
      %p127 = scmp.ne.s32.totalorder %s116, %s117
      %p128 = scmp.eq.s32.totalorder %s16, 0
      %p129 = por %p127, %p128
      %p130 = scmp.ne.s32.totalorder %s116, %s117
      %p131 = scmp.eq.s32.totalorder %s17, 7
      %p132 = por %p130, %p131
      %p134 = scmp.ne.s32.totalorder %s117, %s133
      %p135 = scmp.eq.s32.totalorder %s17, 0
      %p136 = por %p134, %p135
      %s137 = ssub.s32 %s18, %s30
      %p138 = scmp.eq.s32.totalorder %s137, 0
      %s140 = sadd.s32 %s139, 1
      %s141 = scalar_select %p138, %s139, %s140
      %p144 = pneg %p138
      %p145 = scmp.eq.s32.totalorder %s11, 7
      %p146 = por %p144, %p145
      %p147 = scmp.ne.s32.totalorder %s139, %s142
      %p148 = scmp.eq.s32.totalorder %s11, 0
      %p149 = por %p147, %p148
      %p150 = scmp.ne.s32.totalorder %s139, %s142
      %p151 = scmp.eq.s32.totalorder %s16, 7
      %p152 = por %p150, %p151
      %p153 = scmp.ne.s32.totalorder %s142, %s143
      %p154 = scmp.eq.s32.totalorder %s16, 0
      %p155 = por %p153, %p154
      %p156 = scmp.ne.s32.totalorder %s142, %s143
      %p157 = scmp.eq.s32.totalorder %s17, 7
      %p158 = por %p156, %p157
      %p160 = scmp.ne.s32.totalorder %s143, %s159
      %p161 = scmp.eq.s32.totalorder %s17, 0
      %p162 = por %p160, %p161
      %p163 = scmp.le.s32.totalorder 1, %s11
      %p164 = scmp.lt.s32.totalorder %s11, 9
      %p165 = pnand %p163, %p164
      %p166 = pneg %p165
      // Predicated region
      $region9: #{policy_forward.3} parent=5 // pred_check
        _
      $region10: #{policy_forward.3} parent=5 // pred_check_branch
        %168 = sbr.rel (%p165) target = $region12
      $region11: #{policy_forward.3} parent=5 // pred_region
        %s169 = ssub.s32 %s11, 1
      $region12: #{policy_forward.3} parent=5 // pred_fallthru
        _
      %p170 = scmp.lt.s32.totalorder %s11, 8
      // Predicated region
      $region13: #{policy_forward.3} parent=5 // pred_check
        %p171 = pneg %p170
      $region14: #{policy_forward.3} parent=5 // pred_check_branch
        %173 = sbr.rel (%p171) target = $region16
      $region15: #{policy_forward.3} parent=5 // pred_region
        // Predicated region
        $region17: #{policy_forward.3} parent=15 // pred_check
          %p174 = pneg %p43
        $region18: #{policy_forward.3} parent=15 // pred_check_branch
          %176 = sbr.rel (%p174) target = $region20
        $region19: #{policy_forward.3} parent=15 // pred_region
          %p177 = scmp.lt.s32.totalorder %s18, 1
          %s178 = scalar_select %p177, %s18, 1
          %s179 = smul.addr %s178, 4
          %s180 = scalar_lea.vmem %s0, %s179
        $region20: #{policy_forward.3} parent=15 // pred_fallthru
          _
        // Predicated region
        $region21: #{policy_forward.3} parent=15 // pred_check
          %p181 = pneg %p69
        $region22: #{policy_forward.3} parent=15 // pred_check_branch
          %183 = sbr.rel (%p181) target = $region24
        $region23: #{policy_forward.3} parent=15 // pred_region
          %s184 = sand.u32 %s59, 1
          %s185 = sand.u32 %s59, 1
          %s186 = smul.addr %s185, 16
          %s187 = scalar_lea.vmem [#allocation6], %s186
          %s188 = smul.addr %s19, 4
          %s189 = scalar_lea.vmem %s1, %s188
          // Predicated region
          $region25: #{policy_forward.3} parent=23 // pred_check
            _
          $region26: #{policy_forward.3} parent=23 // pred_check_branch
            %191 = sbr.rel (0) target = $region28
          $region27: #{policy_forward.3} parent=23 // pred_region
            // Predicated region
            $region29: #{policy_forward.3} parent=27 // pred_check
              _
            $region30: #{policy_forward.3} parent=27 // pred_check_branch
              %193 = sbr.rel target = $region32
            $region31: #{policy_forward.3} parent=27 // pred_region
              // Predicated region
              $region44: #{policy_forward.3} parent=31 // pred_check
                _
              $region45: #{policy_forward.3} parent=31 // pred_check_branch
                %215 = sbr.rel (0) target = $region47
              $region46: #{policy_forward.3} parent=31 // pred_region
                loop: start=0, step=1, limit=1
                $region48: #{policy_forward.3} parent=46 // loop_pre_header
                  _
                $region49: #{policy_forward.3} parent=46 // loop_header
                  %s217 = sphi 0, %s221
                  %p218 = scmp.ge.s32.totalorder %s217, 1
                  %s222 = sphi %s189, %s189
                  %s223 = sphi %s187, %s187
                $region50: #{policy_forward.3} parent=46 // loop_header_branch
                  %220 = sbr.rel (%p218) target = $region54
                $region51: #{policy_forward.3} parent=46 // loop_body
                  _
                $region52: #{policy_forward.3} parent=46 // loop_footer
                  %s221 = sadd.s32 1, %s217
                $region53: #{policy_forward.3} parent=46 // loop_footer_branch
                  %216 = sbr.rel target = $region49
                $region54: #{policy_forward.3} parent=46 // loop_exit
                  _
                %s225 = ssub.s32 16, 1
                loop: start=0, step=1, limit=1
                $region55: #{policy_forward.3} parent=46 // loop_pre_header
                  _
                $region56: #{policy_forward.3} parent=46 // loop_header
                  %s227 = sphi 0, %s231
                  %p228 = scmp.ge.s32.totalorder %s227, 1
                  %s232 = sphi %s189, %s189
                  %s233 = sphi %s187, %s187
                $region57: #{policy_forward.3} parent=46 // loop_header_branch
                  %230 = sbr.rel (%p228) target = $region61
                $region58: #{policy_forward.3} parent=46 // loop_body
                  %v234 = vld [vmem:[%s232] sm:%s225]
                  %235 = vst [vmem:[%s233] sm:%s225] %v234
                  %v236 = vld [vmem:[%s232 + $0x10] sm:%s225]
                  %237 = vst [vmem:[%s233 + $0x4] sm:%s225] %v236
                  %v238 = vld [vmem:[%s232 + $0x20] sm:%s225]
                  %239 = vst [vmem:[%s233 + $0x8] sm:%s225] %v238
                  %v240 = vld [vmem:[%s232 + $0x30] sm:%s225]
                  %241 = vst [vmem:[%s233 + $0xc] sm:%s225] %v240
                $region59: #{policy_forward.3} parent=46 // loop_footer
                  %s231 = sadd.s32 1, %s227
                $region60: #{policy_forward.3} parent=46 // loop_footer_branch
                  %226 = sbr.rel target = $region56
                $region61: #{policy_forward.3} parent=46 // loop_exit
                  _
              $region47: #{policy_forward.3} parent=31 // pred_fallthru
                _
            $region32: #{policy_forward.3} parent=27 // pred_fallthru
              _
            // Predicated region
            $region33: #{policy_forward.3} parent=27 // pred_check
              _
            $region34: #{policy_forward.3} parent=27 // pred_check_branch
              %195 = sbr.rel (0) target = $region36
            $region35: #{policy_forward.3} parent=27 // pred_region
              %s197 = ssub.s32 16, 1
              loop: start=0, step=1, limit=1
              $region37: #{policy_forward.3} parent=35 // loop_pre_header
                _
              $region38: #{policy_forward.3} parent=35 // loop_header
                %s199 = sphi 0, %s203
                %p200 = scmp.ge.s32.totalorder %s199, 1
                %s204 = sphi %s189, %s189
                %s205 = sphi %s187, %s187
              $region39: #{policy_forward.3} parent=35 // loop_header_branch
                %202 = sbr.rel (%p200) target = $region43
              $region40: #{policy_forward.3} parent=35 // loop_body
                %v206 = vld [vmem:[%s204] sm:%s197]
                %207 = vst [vmem:[%s205] sm:%s197] %v206
                %v208 = vld [vmem:[%s204 + $0x10] sm:%s197]
                %209 = vst [vmem:[%s205 + $0x4] sm:%s197] %v208
                %v210 = vld [vmem:[%s204 + $0x20] sm:%s197]
                %211 = vst [vmem:[%s205 + $0x8] sm:%s197] %v210
                %v212 = vld [vmem:[%s204 + $0x30] sm:%s197]
                %213 = vst [vmem:[%s205 + $0xc] sm:%s197] %v212
              $region41: #{policy_forward.3} parent=35 // loop_footer
                %s203 = sadd.s32 1, %s199
              $region42: #{policy_forward.3} parent=35 // loop_footer_branch
                %198 = sbr.rel target = $region38
              $region43: #{policy_forward.3} parent=35 // loop_exit
                _
            $region36: #{policy_forward.3} parent=27 // pred_fallthru
              _
          $region28: #{policy_forward.3} parent=23 // pred_fallthru
            _
          %242 = vnop
        $region24: #{policy_forward.3} parent=15 // pred_fallthru
          _
        // Predicated region
        $region62: #{policy_forward.3} parent=15 // pred_check
          %p243 = pneg %p95
        $region63: #{policy_forward.3} parent=15 // pred_check_branch
          %245 = sbr.rel (%p243) target = $region65
        $region64: #{policy_forward.3} parent=15 // pred_region
          %p246 = scmp.lt.s32.totalorder %s18, 1
          %s247 = scalar_select %p246, %s18, 1
          %s248 = smul.addr %s247, 8
          %s249 = scalar_lea.vmem %s2, %s248
        $region65: #{policy_forward.3} parent=15 // pred_fallthru
          _
      $region16: #{policy_forward.3} parent=5 // pred_fallthru
        _
      %p250 = scmp.le.s32.totalorder 1, %s11
      %p251 = scmp.lt.s32.totalorder %s11, 9
      %p252 = pnand %p250, %p251
      %p253 = pneg %p252
      // Predicated region
      $region66: #{policy_forward.3} parent=5 // pred_check
        _
      $region67: #{policy_forward.3} parent=5 // pred_check_branch
        %255 = sbr.rel (%p252) target = $region69
      $region68: #{policy_forward.3} parent=5 // pred_region
        %s256 = ssub.s32 %s11, 1
        %s257 = sand.u32 %s62, 1
        %s258 = sand.u32 %s62, 1
        %s259 = smul.addr %s258, 16
        %s260 = scalar_lea.vmem [#allocation6], %s259
        // Predicated region
        $region70: #{policy_forward.3} parent=68 // pred_check
          %p261 = pneg %p75
        $region71: #{policy_forward.3} parent=68 // pred_check_branch
          %263 = sbr.rel (%p261) target = $region73
        $region72: #{policy_forward.3} parent=68 // pred_region
          _
        $region73: #{policy_forward.3} parent=68 // pred_fallthru
          _
        %p264 = scmp.lt.s32.totalorder %s20, 1
        %s265 = scalar_select %p264, %s20, 1
        %s266 = smul.addr %s265, 4
        %s267 = scalar_lea.vmem %s0, %s266
        %p268 = pneg %p49
        %p269 = pneg %p46
        %s270 = sand.u32 %s62, 1
        %s271 = sand.u32 %s62, 1
        %s272 = smul.addr %s271, 16
        %s273 = scalar_lea.vmem [#allocation6], %s272
        %p274 = pneg %p75
        %p275 = pneg %p72
        %p276 = scmp.lt.s32.totalorder %s20, 1
        %s277 = scalar_select %p276, %s20, 1
        %s278 = smul.addr %s277, 8
        %s279 = scalar_lea.vmem %s2, %s278
        %p280 = pneg %p101
        %p281 = pneg %p98
        %p282 = pneg %p129
        %p283 = pneg %p126
        %p284 = scmp.lt.s32.totalorder %s20, 1
        %s285 = scalar_select %p284, %s20, 1
        %p286 = scmp.lt.s32.totalorder %s21, 3
        %s287 = scalar_select %p286, %s21, 3
        %s288 = smul.addr %s285, 4
        %s289 = sadd.s32 %s287, %s288
        %s290 = smul.addr %s289, 8
        %s291 = scalar_lea.vmem %s3, %s290
        %p292 = pneg %p155
        %p293 = pneg %p152
        %p294 = scmp.lt.s32.totalorder %s20, 1
        %s295 = scalar_select %p294, %s20, 1
        %s296 = smul.addr %s295, 8
        %s297 = scalar_lea.vmem %s4, %s296
        %p298 = scmp.lt.s32.totalorder %s20, 1
        %s299 = scalar_select %p298, %s20, 1
        %s300 = smul.addr %s299, 4
        %s301 = scalar_lea.vmem %s0, %s300
        %p302 = scmp.lt.s32.totalorder %s20, 1
        %s303 = scalar_select %p302, %s20, 1
        %s304 = smul.addr %s303, 8
        %s305 = scalar_lea.vmem %s2, %s304
        %p306 = scmp.lt.s32.totalorder %s20, 1
        %s307 = scalar_select %p306, %s20, 1
        %p308 = scmp.lt.s32.totalorder %s21, 3
        %s309 = scalar_select %p308, %s21, 3
        %s310 = smul.addr %s307, 4
        %s311 = sadd.s32 %s309, %s310
        %s312 = smul.addr %s311, 8
        %s313 = scalar_lea.vmem %s3, %s312
        %p314 = scmp.lt.s32.totalorder %s20, 1
        %s315 = scalar_select %p314, %s20, 1
        %s316 = smul.addr %s315, 8
        %s317 = scalar_lea.vmem %s4, %s316
        %p319 = scmp.eq.s32.totalorder %s21, 0
        // Predicated region
        $region74: #{policy_forward.3} parent=68 // pred_check
          %p320 = pneg %p319
        $region75: #{policy_forward.3} parent=68 // pred_check_branch
          %322 = sbr.rel (%p320) target = $region77
        $region76: #{policy_forward.3} parent=68 // pred_region
          %vm323 = vcmask 7168
          %324 = vst.msk [vmem:[#allocation2] sm:$0xff] %vm323, -inf
          %325 = vst.msk [vmem:[#allocation3] sm:$0xff] %vm323, 0.0
          %326 = vst.msk [vmem:[#allocation4] sm:$0xff] %vm323, 0.0
          %327 = vst.msk [vmem:[#allocation5] sm:$0xff] %vm323, 0.0
        $region77: #{policy_forward.3} parent=68 // pred_fallthru
          _
        %v328 = vld [vmem:[%s301] sm:$0xf]
        %v329 = vld [vmem:[%s260] sm:$0xf]
        %v330 = vld [vmem:[%s260 + $0x4] sm:$0xf]
        %v331 = vld [vmem:[%s260 + $0x8] sm:$0xf]
        %v332 = vld [vmem:[%s260 + $0xc] sm:$0xf]
        %v337 = vunpack.c.l.b16 %v329
        %v338 = vunpack.c.l.b16 %v330
        %v339 = vunpack.c.l.b16 %v331
        %v340 = vunpack.c.l.b16 %v332
        %v341 = vpack.c.b16 %v338, %v337
        %v342 = vpack.c.b16 %v340, %v339
        %vm345 = vcmask 261120
        %v347 = vsel %vm345, %v328, 0
        %349 = vmatpush.bf16.msra.mxu0 0
        %350 = vmatpush.bf16.msra.mxu0 0
        %351 = vmatpush.bf16.msra.mxu0 0
        %352 = vmatpush.bf16.msra.mxu0 0
        %353 = vmatpush.bf16.msra.mxu0 0
        %354 = vmatpush.bf16.msra.mxu0 0
        %355 = vmatpush.bf16.msra.mxu0 %v342
        %356 = vmatpush.bf16.msra.mxu0 %v341
        %357 = vmatmul.bf16.gmra.mxu0 %v347
        %v358 = vpop.f32.mrf.mxu0
        %v359 = vadd.f32 0.0, %v358
        %v360 = vpop.f32.mrf.mxu0
        %361 = vdwg.mxu0
        %362 = vst [vmem:[%s313] sm:$0xff] %v359
        %v363 = vmul.f32 %v359, 1.4285715
        %v364 = vld [vmem:[#allocation2] sm:$0xff]
        %365 = vmax.xlane.f32.xlu0 %v363
        %v366 = vpop.xlane.xlu0 %365
        %v367 = vmax.f32 %v364, %v366
        %v368 = vsub.f32 %v364, %v367
        %v369 = vmul.f32 %v368, 1.442695
        %v370 = vpow.pop %v369
        %372 = vset.pattern.permute.xlu0 0
        %373 = vperm.xlu0 %372, %v367
        %v374 = vpop.permute.xlu0 %373
        %v376 = vsub.f32 %v363, %v374
        %v377 = vmul.f32 %v376, 1.442695
        %v378 = vpow.pop %v377
        %v379 = vld [vmem:[#allocation3] sm:$0xff]
        %v380 = vmul.f32 %v370, %v379
        %381 = vadd.xlane.f32.xlu0 %v378
        %v382 = vpop.xlane.xlu0 %381
        %v383 = vadd.f32 %v380, %v382
        %vm384 = vcmask 7168
        %385 = vst.msk [vmem:[#allocation3] sm:$0xff] %vm384, %v383
        %v386 = vld [vmem:[#allocation4] sm:$0xff]
        %v387 = vmul.f32 %v370, %v386
        %v388 = vmul.f32 %v378, %v363
        %389 = vadd.xlane.f32.xlu0 %v388
        %v390 = vpop.xlane.xlu0 %389
        %v391 = vadd.f32 %v387, %v390
        %392 = vst.msk [vmem:[#allocation4] sm:$0xff] %vm384, %v391
        %393 = vst.msk [vmem:[#allocation2] sm:$0xff] %vm384, %v367
        %v394 = vlaneseq
        %v395 = vand.u32 %v394, 127
        %s396 = smul.u32 %s21, 128
        %v397 = vstv %s396
        %v398 = vadd.s32 %v395, %v397
        %v399 = vld [vmem:[%s305] sm:$0xff]
        %400 = vset.pattern.permute.xlu0 0
        %401 = vperm.xlu0 %400, %v399
        %v402 = vpop.permute.xlu0 %401
        %vm403 = vcmp.eq.s32.totalorder %v398, %v402
        %v404 = vld [vmem:[#allocation5] sm:$0xff]
        %v405 = vsel %vm403, %v363, 0.0
        %406 = vadd.xlane.f32.xlu0 %v405
        %v407 = vpop.xlane.xlu0 %406
        %v408 = vadd.f32 %v404, %v407
        %409 = vst.msk [vmem:[#allocation5] sm:$0xff] %vm384, %v408
        %p410 = scmp.eq.s32.totalorder %s21, 3
        // Predicated region
        $region78: #{policy_forward.3} parent=68 // pred_check
          %p411 = pneg %p410
        $region79: #{policy_forward.3} parent=68 // pred_check_branch
          %413 = sbr.rel (%p411) target = $region81
        $region80: #{policy_forward.3} parent=68 // pred_region
          %v414 = vld [vmem:[#allocation2] sm:$0xff]
          %v415 = vld [vmem:[#allocation3] sm:$0xff]
          %v416 = vlog2.pop %v415
          %v417 = vmul.f32 %v416, 0.6931472
          %v418 = vld [vmem:[#allocation5] sm:$0xff]
          %v419 = vsub.f32 %v418, %v414
          %v420 = vsub.f32 %v419, %v417
          %v421 = vadd.f32 %v414, %v417
          %v422 = vld [vmem:[#allocation4] sm:$0xff]
          %v423 = vrcp.pop %v415
          %v424 = vmul.f32 %v415, %v423
          %v425 = vsub.f32 1.0, %v424
          %v426 = vmul.f32 %v423, %v425
          %v427 = vadd.f32 %v423, %v426
          %vm428 = vweird.f32 %v415
          %vm429 = vweird.f32 %v423
          %vm430 = vmor %vm428, %vm429
          %v431 = vsel %vm430, %v423, %v427
          %v432 = vand.u32 2147483647, %v415
          %vm433 = vcmp.eq.f32.partialorder %v432, 8.507059e+37
          %v434 = vand.u32 %v415, 2147483648
          %v435 = vor.u32 1.1754944e-38, %v434
          %v436 = vsel %vm433, %v435, %v431
          %v437 = vmul.f32 %v422, %v436
          %v438 = vsub.f32 %v421, %v437
          %vm439 = vcmp.eq.s32.totalorder %v395, 0
          %vm440 = vcmp.eq.s32.totalorder %v395, 1
          %442 = vset.pattern.permute.xlu0 0
          %443 = vperm.xlu0 %442, %v438
          %v444 = vpop.permute.xlu0 %443
          %v446 = vsel %vm440, %v444, 0.0
          %448 = vset.pattern.permute.xlu0 0
          %449 = vperm.xlu0 %448, %v420
          %v450 = vpop.permute.xlu0 %449
          %v452 = vsel %vm439, %v450, %v446
          %453 = vst [vmem:[%s317] sm:$0xff] %v452
        $region81: #{policy_forward.3} parent=68 // pred_fallthru
          _
        %p454 = scmp.lt.s32.totalorder %s20, 1
        %s455 = scalar_select %p454, %s20, 1
        %p456 = scmp.lt.s32.totalorder %s21, 3
        %s457 = scalar_select %p456, %s21, 3
        %s458 = smul.addr %s455, 4
        %s459 = sadd.s32 %s457, %s458
        %s460 = smul.addr %s459, 8
        %s461 = scalar_lea.vmem %s3, %s460
        %p462 = scmp.lt.s32.totalorder %s20, 1
        %s463 = scalar_select %p462, %s20, 1
        %s464 = smul.addr %s463, 8
        %s465 = scalar_lea.vmem %s4, %s464
        // Predicated region
        $region82: #{policy_forward.3} parent=68 // pred_check
          %p466 = pneg %p126
        $region83: #{policy_forward.3} parent=68 // pred_check_branch
          %468 = sbr.rel (%p466) target = $region85
        $region84: #{policy_forward.3} parent=68 // pred_region
          _
        $region85: #{policy_forward.3} parent=68 // pred_fallthru
          _
        // Predicated region
        $region86: #{policy_forward.3} parent=68 // pred_check
          %p469 = pneg %p152
        $region87: #{policy_forward.3} parent=68 // pred_check_branch
          %471 = sbr.rel (%p469) target = $region89
        $region88: #{policy_forward.3} parent=68 // pred_region
          _
        $region89: #{policy_forward.3} parent=68 // pred_fallthru
          _
      $region69: #{policy_forward.3} parent=5 // pred_fallthru
        _
      %p472 = scmp.le.s32.totalorder 2, %s11
      // Predicated region
      $region90: #{policy_forward.3} parent=5 // pred_check
        %p473 = pneg %p472
      $region91: #{policy_forward.3} parent=5 // pred_check_branch
        %475 = sbr.rel (%p473) target = $region93
      $region92: #{policy_forward.3} parent=5 // pred_region
        %s476 = ssub.s32 %s11, 2
        // Predicated region
        $region94: #{policy_forward.3} parent=92 // pred_check
          %p477 = pneg %p132
        $region95: #{policy_forward.3} parent=92 // pred_check_branch
          %479 = sbr.rel (%p477) target = $region97
        $region96: #{policy_forward.3} parent=92 // pred_region
          %p480 = scmp.lt.s32.totalorder %s22, 1
          %s481 = scalar_select %p480, %s22, 1
          %p482 = scmp.lt.s32.totalorder %s23, 3
          %s483 = scalar_select %p482, %s23, 3
          %s484 = smul.addr %s481, 4
          %s485 = sadd.s32 %s483, %s484
          %s486 = smul.addr %s485, 8
          %s487 = scalar_lea.vmem %s3, %s486
        $region97: #{policy_forward.3} parent=92 // pred_fallthru
          _
        // Predicated region
        $region98: #{policy_forward.3} parent=92 // pred_check
          %p488 = pneg %p158
        $region99: #{policy_forward.3} parent=92 // pred_check_branch
          %490 = sbr.rel (%p488) target = $region101
        $region100: #{policy_forward.3} parent=92 // pred_region
          %p491 = scmp.lt.s32.totalorder %s22, 1
          %s492 = scalar_select %p491, %s22, 1
          %s493 = smul.addr %s492, 8
          %s494 = scalar_lea.vmem %s4, %s493
        $region101: #{policy_forward.3} parent=92 // pred_fallthru
          _
      $region93: #{policy_forward.3} parent=5 // pred_fallthru
        _
    $region6: #{policy_forward.3} parent=1 // loop_footer
      %s15 = sadd.s32 1, %s11
    $region7: #{policy_forward.3} parent=1 // loop_footer_branch
      %10 = sbr.rel target = $region3
    $region8: #{policy_forward.3} parent=1 // loop_exit
      _

// kernel: policy_forward.2
$region0: #{policy_forward.2}
  #allocation0 [shape = 'u32[]', space=smem, size = 0x4, offset = 0x4, fixed_abs, tag = 'smem constant byte address 0x4 - core index']
  #allocation1 [shape = 'u32[72,128]{1,0:T(1,128)}', space=vmem, size = 0x9000, scoped, tag = 'internal scratch']
  %s0 = inlined_call_operand.vmem [shape: f32[26,32], index: 0, kind: input, shape index: {}]
  %s1 = inlined_call_operand.vmem [shape: f32[26,26], index: 1, kind: input, shape index: {}]
  %s2 = inlined_call_operand.vmem [shape: bf16[32,32], index: 2, kind: input, shape index: {}]
  %s3 = inlined_call_operand.vmem [shape: bf16[32,32], index: 3, kind: input, shape index: {}]
  %s4 = inlined_call_operand.vmem [shape: bf16[32,32], index: 4, kind: input, shape index: {}]
  %s5 = inlined_call_operand.vmem [shape: bf16[32,32], index: 5, kind: input, shape index: {}]
  %s6 = inlined_call_operand.vmem [shape: bf16[32,128], index: 6, kind: input, shape index: {}]
  %s7 = inlined_call_operand.vmem [shape: bf16[128,32], index: 7, kind: input, shape index: {}]
  %s8 = inlined_call_operand.vmem [shape: f32[26,32], index: 8, kind: output, shape index: {}]
  %s9 = sld [smem:[#allocation0]]
  $region42: #{policy_forward.2} parent=0
    _
  %s11 = ssub.s32 1, %s9
  %s12 = scalar_select 0, %s11, %s9
  // Predicated region
  $region2: #{policy_forward.2} parent=0 // pred_check
    _
  $region3: #{policy_forward.2} parent=0 // pred_check_branch
    %14 = sbr.rel (0) target = $region5
  $region4: #{policy_forward.2} parent=0 // pred_region
    _
  $region5: #{policy_forward.2} parent=0 // pred_fallthru
    _
  // Predicated region
  $region6: #{policy_forward.2} parent=0 // pred_check
    _
  $region7: #{policy_forward.2} parent=0 // pred_check_branch
    %16 = sbr.rel (0) target = $region9
  $region8: #{policy_forward.2} parent=0 // pred_region
    _
  $region9: #{policy_forward.2} parent=0 // pred_fallthru
    _
  // Predicated region
  $region10: #{policy_forward.2} parent=0 // pred_check
    _
  $region11: #{policy_forward.2} parent=0 // pred_check_branch
    %18 = sbr.rel (0) target = $region13
  $region12: #{policy_forward.2} parent=0 // pred_region
    _
  $region13: #{policy_forward.2} parent=0 // pred_fallthru
    _
  // Predicated region
  $region14: #{policy_forward.2} parent=0 // pred_check
    _
  $region15: #{policy_forward.2} parent=0 // pred_check_branch
    %20 = sbr.rel (0) target = $region17
  $region16: #{policy_forward.2} parent=0 // pred_region
    _
  $region17: #{policy_forward.2} parent=0 // pred_fallthru
    _
  // Predicated region
  $region18: #{policy_forward.2} parent=0 // pred_check
    _
  $region19: #{policy_forward.2} parent=0 // pred_check_branch
    %22 = sbr.rel (0) target = $region21
  $region20: #{policy_forward.2} parent=0 // pred_region
    _
  $region21: #{policy_forward.2} parent=0 // pred_fallthru
    _
  // Predicated region
  $region22: #{policy_forward.2} parent=0 // pred_check
    _
  $region23: #{policy_forward.2} parent=0 // pred_check_branch
    %24 = sbr.rel (0) target = $region25
  $region24: #{policy_forward.2} parent=0 // pred_region
    _
  $region25: #{policy_forward.2} parent=0 // pred_fallthru
    _
  // Predicated region
  $region26: #{policy_forward.2} parent=0 // pred_check
    _
  $region27: #{policy_forward.2} parent=0 // pred_check_branch
    %26 = sbr.rel (0) target = $region29
  $region28: #{policy_forward.2} parent=0 // pred_region
    _
  $region29: #{policy_forward.2} parent=0 // pred_fallthru
    _
  // Predicated region
  $region30: #{policy_forward.2} parent=0 // pred_check
    _
  $region31: #{policy_forward.2} parent=0 // pred_check_branch
    %28 = sbr.rel (0) target = $region33
  $region32: #{policy_forward.2} parent=0 // pred_region
    _
  $region33: #{policy_forward.2} parent=0 // pred_fallthru
    _
  %v30 = vld [vmem:[%s0] sm:$0xff]
  %v31 = vld [vmem:[%s0 + $0x8] sm:$0xff]
  %v32 = vld [vmem:[%s0 + $0x10] sm:$0xff]
  %v33 = vld [vmem:[%s0 + $0x18] sm:$0x3]
  %v34 = vld [vmem:[%s1] sm:$0xff]
  %v35 = vld [vmem:[%s1 + $0x8] sm:$0xff]
  %v36 = vld [vmem:[%s1 + $0x10] sm:$0xff]
  %v37 = vld [vmem:[%s1 + $0x18] sm:$0x3]
  %vm38 = vcmask 261120
  %v39 = vsel %vm38, %v30, 0.0
  %40 = vadd.xlane.f32.xlu0 %v39
  %v41 = vpop.xlane.xlu0 %40
  %v42 = vsel %vm38, %v31, 0.0
  %43 = vadd.xlane.f32.xlu0 %v42
  %v44 = vpop.xlane.xlu0 %43
  %v45 = vsel %vm38, %v32, 0.0
  %46 = vadd.xlane.f32.xlu0 %v45
  %v47 = vpop.xlane.xlu0 %46
  %vm48 = vcmask 254976
  %v49 = vsel %vm48, %v33, 0.0
  %50 = vadd.xlane.f32.xlu0 %v49
  %v51 = vpop.xlane.xlu0 %50
  %v52 = vrcp.pop 32.0
  %v53 = vmul.f32 32.0, %v52
  %v54 = vsub.f32 1.0, %v53
  %v55 = vmul.f32 %v52, %v54
  %v56 = vadd.f32 %v52, %v55
  %vm57 = vweird.f32 %v52
  %v58 = vsel %vm57, %v52, %v56
  %v59 = vmul.f32 %v41, %v58
  %v60 = vmul.f32 %v44, %v58
  %v61 = vmul.f32 %v47, %v58
  %v62 = vmul.f32 %v51, %v58
  %v63 = vsub.f32 %v30, %v59
  %v64 = vsub.f32 %v31, %v60
  %v65 = vsub.f32 %v32, %v61
  %v66 = vsub.f32 %v33, %v62
  %v67 = vmul.f32 %v63, %v63
  %v68 = vmul.f32 %v64, %v64
  %v69 = vmul.f32 %v65, %v65
  %v70 = vmul.f32 %v66, %v66
  %v71 = vsel %vm38, %v67, 0.0
  %72 = vadd.xlane.f32.xlu0 %v71
  %v73 = vpop.xlane.xlu0 %72
  %v74 = vsel %vm38, %v68, 0.0
  %75 = vadd.xlane.f32.xlu0 %v74
  %v76 = vpop.xlane.xlu0 %75
  %v77 = vsel %vm38, %v69, 0.0
  %78 = vadd.xlane.f32.xlu0 %v77
  %v79 = vpop.xlane.xlu0 %78
  %v80 = vsel %vm48, %v70, 0.0
  %81 = vadd.xlane.f32.xlu0 %v80
  %v82 = vpop.xlane.xlu0 %81
  %v83 = vmul.f32 %v73, %v58
  %v84 = vmul.f32 %v76, %v58
  %v85 = vmul.f32 %v79, %v58
  %v86 = vmul.f32 %v82, %v58
  %v87 = vadd.f32 %v83, 1e-05
  %v88 = vadd.f32 %v84, 1e-05
  %v89 = vadd.f32 %v85, 1e-05
  %v90 = vadd.f32 %v86, 1e-05
  %v91 = vrsqrt.pop %v87
  %v92 = vmul.f32 %v91, %v87
  %v93 = vmul.f32 %v92, %v91
  %v94 = vmul.f32 0.5, %v93
  %v95 = vsub.f32 1.5, %v94
  %v96 = vmul.f32 %v91, %v95
  %vm97 = vweird.f32 %v87
  %vm98 = vweird.f32 %v91
  %vm99 = vmor %vm97, %vm98
  %v100 = vsel %vm99, %v91, %v96
  %v101 = vrsqrt.pop %v88
  %v102 = vmul.f32 %v101, %v88
  %v103 = vmul.f32 %v102, %v101
  %v104 = vmul.f32 0.5, %v103
  %v105 = vsub.f32 1.5, %v104
  %v106 = vmul.f32 %v101, %v105
  %vm107 = vweird.f32 %v88
  %vm108 = vweird.f32 %v101
  %vm109 = vmor %vm107, %vm108
  %v110 = vsel %vm109, %v101, %v106
  %v111 = vrsqrt.pop %v89
  %v112 = vmul.f32 %v111, %v89
  %v113 = vmul.f32 %v112, %v111
  %v114 = vmul.f32 0.5, %v113
  %v115 = vsub.f32 1.5, %v114
  %v116 = vmul.f32 %v111, %v115
  %vm117 = vweird.f32 %v89
  %vm118 = vweird.f32 %v111
  %vm119 = vmor %vm117, %vm118
  %v120 = vsel %vm119, %v111, %v116
  %v121 = vrsqrt.pop %v90
  %v122 = vmul.f32 %v121, %v90
  %v123 = vmul.f32 %v122, %v121
  %v124 = vmul.f32 0.5, %v123
  %v125 = vsub.f32 1.5, %v124
  %v126 = vmul.f32 %v121, %v125
  %vm127 = vweird.f32 %v90
  %vm128 = vweird.f32 %v121
  %vm129 = vmor %vm127, %vm128
  %v130 = vsel %vm129, %v121, %v126
  %v131 = vmul.f32 %v63, %v100
  %v132 = vmul.f32 %v64, %v110
  %v133 = vmul.f32 %v65, %v120
  %v134 = vmul.f32 %v66, %v130
  %v135 = vpack.c.bf16 %v132, %v131
  %v136 = vpack.c.bf16 %v134, %v133
  %v137 = vld [vmem:[%s2] sm:$0xf]
  %v138 = vld [vmem:[%s2 + $0x4] sm:$0xf]
  %v139 = vld [vmem:[%s2 + $0x8] sm:$0xf]
  %v140 = vld [vmem:[%s2 + $0xc] sm:$0xf]
  %v145 = vunpack.c.l.b16 %v137
  %v146 = vunpack.c.l.b16 %v138
  %v147 = vunpack.c.l.b16 %v139
  %v148 = vunpack.c.l.b16 %v140
  %v149 = vpack.c.b16 %v146, %v145
  %v150 = vpack.c.b16 %v148, %v147
  %v154 = vsel %vm38, %v135, 0
  %v157 = vsel %vm38, %v136, 0
  %159 = vmatpush.bf16.msra.mxu0 0
  %160 = vmatpush.bf16.msra.mxu0 0
  %161 = vmatpush.bf16.msra.mxu0 0
  %162 = vmatpush.bf16.msra.mxu0 0
  %163 = vmatpush.bf16.msra.mxu0 0
  %164 = vmatpush.bf16.msra.mxu0 0
  %165 = vmatpush.bf16.msra.mxu0 %v150
  %166 = vmatpush.bf16.msra.mxu0 %v149
  %167 = vmatmul.bf16.gmra.mxu0 %v154
  %v168 = vpop.f32.mrf.mxu0
  %v169 = vadd.f32 0.0, %v168
  %v170 = vpop.f32.mrf.mxu0
  %v171 = vadd.f32 0.0, %v170
  %172 = vmatmul.bf16.gmra.mxu0 %v157
  %v173 = vpop.f32.mrf.mxu0
  %v174 = vadd.f32 0.0, %v173
  %v175 = vpop.f32.mrf.mxu0
  %v176 = vadd.f32 0.0, %v175
  %177 = vdwg.mxu0
  %v178 = vld [vmem:[%s3] sm:$0xf]
  %v179 = vld [vmem:[%s3 + $0x4] sm:$0xf]
  %v180 = vld [vmem:[%s3 + $0x8] sm:$0xf]
  %v181 = vld [vmem:[%s3 + $0xc] sm:$0xf]
  %v186 = vunpack.c.l.b16 %v178
  %v187 = vunpack.c.l.b16 %v179
  %v188 = vunpack.c.l.b16 %v180
  %v189 = vunpack.c.l.b16 %v181
  %v190 = vpack.c.b16 %v187, %v186
  %v191 = vpack.c.b16 %v189, %v188
  %194 = vmatpush.bf16.msra.mxu0 0
  %195 = vmatpush.bf16.msra.mxu0 0
  %196 = vmatpush.bf16.msra.mxu0 0
  %197 = vmatpush.bf16.msra.mxu0 0
  %198 = vmatpush.bf16.msra.mxu0 0
  %199 = vmatpush.bf16.msra.mxu0 0
  %200 = vmatpush.bf16.msra.mxu0 %v191
  %201 = vmatpush.bf16.msra.mxu0 %v190
  %202 = vmatmul.bf16.gmra.mxu0 %v154
  %v203 = vpop.f32.mrf.mxu0
  %v204 = vadd.f32 0.0, %v203
  %v205 = vpop.f32.mrf.mxu0
  %v206 = vadd.f32 0.0, %v205
  %207 = vmatmul.bf16.gmra.mxu0 %v157
  %v208 = vpop.f32.mrf.mxu0
  %v209 = vadd.f32 0.0, %v208
  %v210 = vpop.f32.mrf.mxu0
  %v211 = vadd.f32 0.0, %v210
  %212 = vdwg.mxu0
  %v213 = vld [vmem:[%s4] sm:$0xf]
  %v214 = vld [vmem:[%s4 + $0x4] sm:$0xf]
  %v215 = vld [vmem:[%s4 + $0x8] sm:$0xf]
  %v216 = vld [vmem:[%s4 + $0xc] sm:$0xf]
  %v221 = vunpack.c.l.b16 %v213
  %v222 = vunpack.c.l.b16 %v214
  %v223 = vunpack.c.l.b16 %v215
  %v224 = vunpack.c.l.b16 %v216
  %v225 = vpack.c.b16 %v222, %v221
  %v226 = vpack.c.b16 %v224, %v223
  %229 = vmatpush.bf16.msra.mxu0 0
  %230 = vmatpush.bf16.msra.mxu0 0
  %231 = vmatpush.bf16.msra.mxu0 0
  %232 = vmatpush.bf16.msra.mxu0 0
  %233 = vmatpush.bf16.msra.mxu0 0
  %234 = vmatpush.bf16.msra.mxu0 0
  %235 = vmatpush.bf16.msra.mxu0 %v226
  %236 = vmatpush.bf16.msra.mxu0 %v225
  %237 = vmatmul.bf16.gmra.mxu0 %v154
  %v238 = vpop.f32.mrf.mxu0
  %v239 = vadd.f32 0.0, %v238
  %v240 = vpop.f32.mrf.mxu0
  %v241 = vadd.f32 0.0, %v240
  %242 = vmatmul.bf16.gmra.mxu0 %v157
  %v243 = vpop.f32.mrf.mxu0
  %v244 = vadd.f32 0.0, %v243
  %v245 = vpop.f32.mrf.mxu0
  %v246 = vadd.f32 0.0, %v245
  %247 = vdwg.mxu0
  %v248 = vpack.c.bf16 %v171, %v169
  %v249 = vpack.c.bf16 %v176, %v174
  %v250 = vpack.c.bf16 %v206, %v204
  %v251 = vpack.c.bf16 %v211, %v209
  %v253 = vsel %vm38, %v248, 0
  %v256 = vsel %vm38, %v249, 0
  %v259 = vsel %vm38, %v250, 0
  %v262 = vsel %vm38, %v251, 0
  %264 = vmatpush.bf16.xpose.msra.mxu0 0
  %265 = vmatpush.bf16.xpose.msra.mxu0 0
  %266 = vmatpush.bf16.xpose.msra.mxu0 0
  %267 = vmatpush.bf16.xpose.msra.mxu0 0
  %268 = vmatpush.bf16.xpose.msra.mxu0 0
  %269 = vmatpush.bf16.xpose.msra.mxu0 0
  %270 = vmatpush.bf16.xpose.msra.mxu0 %v262
  %271 = vmatpush.bf16.xpose.msra.mxu0 %v259
  %272 = vmatmul.bf16.gmra.mxu0 %v253
  %v273 = vpop.f32.mrf.mxu0
  %v274 = vadd.f32 0.0, %v273
  %v275 = vpop.f32.mrf.mxu0
  %v276 = vadd.f32 0.0, %v275
  %277 = vmatmul.bf16.gmra.mxu0 %v256
  %v278 = vpop.f32.mrf.mxu0
  %v279 = vadd.f32 0.0, %v278
  %v280 = vpop.f32.mrf.mxu0
  %v281 = vadd.f32 0.0, %v280
  %282 = vdwg.mxu0
  %v283 = vmul.f32 %v274, 0.17677669
  %v284 = vmul.f32 %v276, 0.17677669
  %v285 = vmul.f32 %v279, 0.17677669
  %v286 = vmul.f32 %v281, 0.17677669
  %vm287 = vcmp.gt.f32.partialorder %v34, 0.5
  %vm288 = vcmp.gt.f32.partialorder %v35, 0.5
  %vm289 = vcmp.gt.f32.partialorder %v36, 0.5
  %vm290 = vcmp.gt.f32.partialorder %v37, 0.5
  %v291 = vsel %vm287, %v283, -1e+09
  %v292 = vsel %vm288, %v284, -1e+09
  %v293 = vsel %vm289, %v285, -1e+09
  %v294 = vsel %vm290, %v286, -1e+09
  %vm295 = vcmask 211968
  %v296 = vsel %vm295, %v291, -inf
  %297 = vmax.xlane.f32.xlu0 %v296
  %v298 = vpop.xlane.xlu0 %297
  %v299 = vsel %vm295, %v292, -inf
  %300 = vmax.xlane.f32.xlu0 %v299
  %v301 = vpop.xlane.xlu0 %300
  %v302 = vsel %vm295, %v293, -inf
  %303 = vmax.xlane.f32.xlu0 %v302
  %v304 = vpop.xlane.xlu0 %303
  %vm305 = vcmask 205824
  %v306 = vsel %vm305, %v294, -inf
  %307 = vmax.xlane.f32.xlu0 %v306
  %v308 = vpop.xlane.xlu0 %307
  %v309 = vsub.f32 %v291, %v298
  %v310 = vsub.f32 %v292, %v301
  %v311 = vsub.f32 %v293, %v304
  %v312 = vsub.f32 %v294, %v308
  %v313 = vmul.f32 %v309, 1.442695
  %v314 = vpow.pop %v313
  %v315 = vmul.f32 %v310, 1.442695
  %v316 = vpow.pop %v315
  %v317 = vmul.f32 %v311, 1.442695
  %v318 = vpow.pop %v317
  %v319 = vmul.f32 %v312, 1.442695
  %v320 = vpow.pop %v319
  %v321 = vsel %vm295, %v314, 0.0
  %322 = vadd.xlane.f32.xlu0 %v321
  %v323 = vpop.xlane.xlu0 %322
  %v324 = vsel %vm295, %v316, 0.0
  %325 = vadd.xlane.f32.xlu0 %v324
  %v326 = vpop.xlane.xlu0 %325
  %v327 = vsel %vm295, %v318, 0.0
  %328 = vadd.xlane.f32.xlu0 %v327
  %v329 = vpop.xlane.xlu0 %328
  %v330 = vsel %vm305, %v320, 0.0
  %331 = vadd.xlane.f32.xlu0 %v330
  %v332 = vpop.xlane.xlu0 %331
  %v333 = vrcp.pop %v323
  %v334 = vrcp.pop %v326
  %v335 = vrcp.pop %v329
  %v336 = vrcp.pop %v332
  %v337 = vmul.f32 %v314, %v333
  %v338 = vmul.f32 %v316, %v334
  %v339 = vmul.f32 %v318, %v335
  %v340 = vmul.f32 %v320, %v336
  %v341 = vpack.c.bf16 %v338, %v337
  %v342 = vpack.c.bf16 %v340, %v339
  %v343 = vpack.c.bf16 %v241, %v239
  %v344 = vpack.c.bf16 %v246, %v244
  %v346 = vsel %vm295, %v341, 0
  %v349 = vsel %vm295, %v342, 0
  %vm351 = vcmask 1044480
  %v353 = vsel %vm351, %v344, 0
  %355 = vmatpush.bf16.msra.mxu0 0
  %356 = vmatpush.bf16.msra.mxu0 0
  %357 = vmatpush.bf16.msra.mxu0 0
  %358 = vmatpush.bf16.msra.mxu0 0
  %359 = vmatpush.bf16.msra.mxu0 0
  %360 = vmatpush.bf16.msra.mxu0 0
  %361 = vmatpush.bf16.msra.mxu0 %v353
  %362 = vmatpush.bf16.msra.mxu0 %v343
  %363 = vmatmul.bf16.gmra.mxu0 %v346
  %v364 = vpop.f32.mrf.mxu0
  %v365 = vadd.f32 0.0, %v364
  %v366 = vpop.f32.mrf.mxu0
  %v367 = vadd.f32 0.0, %v366
  %368 = vmatmul.bf16.gmra.mxu0 %v349
  %v369 = vpop.f32.mrf.mxu0
  %v370 = vadd.f32 0.0, %v369
  %v371 = vpop.f32.mrf.mxu0
  %v372 = vadd.f32 0.0, %v371
  %373 = vdwg.mxu0
  %v374 = vpack.c.bf16 %v367, %v365
  %v375 = vpack.c.bf16 %v372, %v370
  %v376 = vld [vmem:[%s5] sm:$0xf]
  %v377 = vld [vmem:[%s5 + $0x4] sm:$0xf]
  %v378 = vld [vmem:[%s5 + $0x8] sm:$0xf]
  %v379 = vld [vmem:[%s5 + $0xc] sm:$0xf]
  %v384 = vunpack.c.l.b16 %v376
  %v385 = vunpack.c.l.b16 %v377
  %v386 = vunpack.c.l.b16 %v378
  %v387 = vunpack.c.l.b16 %v379
  %v388 = vpack.c.b16 %v385, %v384
  %v389 = vpack.c.b16 %v387, %v386
  %v393 = vsel %vm38, %v374, 0
  %v396 = vsel %vm38, %v375, 0
  %398 = vmatpush.bf16.msra.mxu0 0
  %399 = vmatpush.bf16.msra.mxu0 0
  %400 = vmatpush.bf16.msra.mxu0 0
  %401 = vmatpush.bf16.msra.mxu0 0
  %402 = vmatpush.bf16.msra.mxu0 0
  %403 = vmatpush.bf16.msra.mxu0 0
  %404 = vmatpush.bf16.msra.mxu0 %v389
  %405 = vmatpush.bf16.msra.mxu0 %v388
  %406 = vmatmul.bf16.gmra.mxu0 %v393
  %v407 = vpop.f32.mrf.mxu0
  %v408 = vadd.f32 0.0, %v407
  %v409 = vpop.f32.mrf.mxu0
  %v410 = vadd.f32 0.0, %v409
  %411 = vmatmul.bf16.gmra.mxu0 %v396
  %v412 = vpop.f32.mrf.mxu0
  %v413 = vadd.f32 0.0, %v412
  %v414 = vpop.f32.mrf.mxu0
  %v415 = vadd.f32 0.0, %v414
  %416 = vdwg.mxu0
  %v417 = vadd.f32 %v30, %v408
  %v418 = vadd.f32 %v31, %v410
  %v419 = vadd.f32 %v32, %v413
  %v420 = vadd.f32 %v33, %v415
  %v421 = vsel %vm38, %v417, 0.0
  %422 = vadd.xlane.f32.xlu0 %v421
  %v423 = vpop.xlane.xlu0 %422
  %v424 = vsel %vm38, %v418, 0.0
  %425 = vadd.xlane.f32.xlu0 %v424
  %v426 = vpop.xlane.xlu0 %425
  %v427 = vsel %vm38, %v419, 0.0
  %428 = vadd.xlane.f32.xlu0 %v427
  %v429 = vpop.xlane.xlu0 %428
  %v430 = vsel %vm48, %v420, 0.0
  %431 = vadd.xlane.f32.xlu0 %v430
  %v432 = vpop.xlane.xlu0 %431
  %v433 = vmul.f32 %v423, %v58
  %v434 = vmul.f32 %v426, %v58
  %v435 = vmul.f32 %v429, %v58
  %v436 = vmul.f32 %v432, %v58
  %v437 = vsub.f32 %v417, %v433
  %v438 = vsub.f32 %v418, %v434
  %v439 = vsub.f32 %v419, %v435
  %v440 = vsub.f32 %v420, %v436
  %v441 = vmul.f32 %v437, %v437
  %v442 = vmul.f32 %v438, %v438
  %v443 = vmul.f32 %v439, %v439
  %v444 = vmul.f32 %v440, %v440
  %v445 = vsel %vm38, %v441, 0.0
  %446 = vadd.xlane.f32.xlu0 %v445
  %v447 = vpop.xlane.xlu0 %446
  %v448 = vsel %vm38, %v442, 0.0
  %449 = vadd.xlane.f32.xlu0 %v448
  %v450 = vpop.xlane.xlu0 %449
  %v451 = vsel %vm38, %v443, 0.0
  %452 = vadd.xlane.f32.xlu0 %v451
  %v453 = vpop.xlane.xlu0 %452
  %v454 = vsel %vm48, %v444, 0.0
  %455 = vadd.xlane.f32.xlu0 %v454
  %v456 = vpop.xlane.xlu0 %455
  %v457 = vmul.f32 %v447, %v58
  %v458 = vmul.f32 %v450, %v58
  %v459 = vmul.f32 %v453, %v58
  %v460 = vmul.f32 %v456, %v58
  %v461 = vadd.f32 %v457, 1e-05
  %v462 = vadd.f32 %v458, 1e-05
  %v463 = vadd.f32 %v459, 1e-05
  %v464 = vadd.f32 %v460, 1e-05
  %v465 = vrsqrt.pop %v461
  %v466 = vmul.f32 %v465, %v461
  %v467 = vmul.f32 %v466, %v465
  %v468 = vmul.f32 0.5, %v467
  %v469 = vsub.f32 1.5, %v468
  %v470 = vmul.f32 %v465, %v469
  %vm471 = vweird.f32 %v461
  %vm472 = vweird.f32 %v465
  %vm473 = vmor %vm471, %vm472
  %v474 = vsel %vm473, %v465, %v470
  %v475 = vrsqrt.pop %v462
  %v476 = vmul.f32 %v475, %v462
  %v477 = vmul.f32 %v476, %v475
  %v478 = vmul.f32 0.5, %v477
  %v479 = vsub.f32 1.5, %v478
  %v480 = vmul.f32 %v475, %v479
  %vm481 = vweird.f32 %v462
  %vm482 = vweird.f32 %v475
  %vm483 = vmor %vm481, %vm482
  %v484 = vsel %vm483, %v475, %v480
  %v485 = vrsqrt.pop %v463
  %v486 = vmul.f32 %v485, %v463
  %v487 = vmul.f32 %v486, %v485
  %v488 = vmul.f32 0.5, %v487
  %v489 = vsub.f32 1.5, %v488
  %v490 = vmul.f32 %v485, %v489
  %vm491 = vweird.f32 %v463
  %vm492 = vweird.f32 %v485
  %vm493 = vmor %vm491, %vm492
  %v494 = vsel %vm493, %v485, %v490
  %v495 = vrsqrt.pop %v464
  %v496 = vmul.f32 %v495, %v464
  %v497 = vmul.f32 %v496, %v495
  %v498 = vmul.f32 0.5, %v497
  %v499 = vsub.f32 1.5, %v498
  %v500 = vmul.f32 %v495, %v499
  %vm501 = vweird.f32 %v464
  %vm502 = vweird.f32 %v495
  %vm503 = vmor %vm501, %vm502
  %v504 = vsel %vm503, %v495, %v500
  %v505 = vmul.f32 %v437, %v474
  %v506 = vmul.f32 %v438, %v484
  %v507 = vmul.f32 %v439, %v494
  %v508 = vmul.f32 %v440, %v504
  %v509 = vpack.c.bf16 %v506, %v505
  %v510 = vpack.c.bf16 %v508, %v507
  %v511 = vld [vmem:[%s6] sm:$0xf]
  %v512 = vld [vmem:[%s6 + $0x4] sm:$0xf]
  %v513 = vld [vmem:[%s6 + $0x8] sm:$0xf]
  %v514 = vld [vmem:[%s6 + $0xc] sm:$0xf]
  %v519 = vunpack.c.l.b16 %v511
  %v520 = vunpack.c.l.b16 %v512
  %v521 = vunpack.c.l.b16 %v513
  %v522 = vunpack.c.l.b16 %v514
  %v523 = vpack.c.b16 %v520, %v519
  %v524 = vpack.c.b16 %v522, %v521
  %v528 = vsel %vm38, %v509, 0
  %v531 = vsel %vm38, %v510, 0
  %533 = vmatpush.bf16.msra.mxu0 0
  %534 = vmatpush.bf16.msra.mxu0 0
  %535 = vmatpush.bf16.msra.mxu0 0
  %536 = vmatpush.bf16.msra.mxu0 0
  %537 = vmatpush.bf16.msra.mxu0 0
  %538 = vmatpush.bf16.msra.mxu0 0
  %539 = vmatpush.bf16.msra.mxu0 %v524
  %540 = vmatpush.bf16.msra.mxu0 %v523
  %541 = vmatmul.bf16.gmra.mxu0 %v528
  %v542 = vpop.f32.mrf.mxu0
  %v543 = vadd.f32 0.0, %v542
  %v544 = vpop.f32.mrf.mxu0
  %v545 = vadd.f32 0.0, %v544
  %546 = vmatmul.bf16.gmra.mxu0 %v531
  %v547 = vpop.f32.mrf.mxu0
  %v548 = vadd.f32 0.0, %v547
  %v549 = vpop.f32.mrf.mxu0
  %v550 = vadd.f32 0.0, %v549
  %551 = vdwg.mxu0
  %v552 = vmul.f32 %v543, %v543
  %v553 = vmul.f32 %v545, %v545
  %v554 = vmul.f32 %v548, %v548
  %v555 = vmul.f32 %v550, %v550
  %v556 = vmul.f32 %v543, %v552
  %v557 = vmul.f32 %v545, %v553
  %v558 = vmul.f32 %v548, %v554
  %v559 = vmul.f32 %v550, %v555
  %v560 = vmul.f32 %v556, 0.044715
  %v561 = vmul.f32 %v557, 0.044715
  %v562 = vmul.f32 %v558, 0.044715
  %v563 = vmul.f32 %v559, 0.044715
  %v564 = vadd.f32 %v543, %v560
  %v565 = vadd.f32 %v545, %v561
  %v566 = vadd.f32 %v548, %v562
  %v567 = vadd.f32 %v550, %v563
  %v568 = vmul.f32 %v564, 0.7978846
  %v569 = vmul.f32 %v565, 0.7978846
  %v570 = vmul.f32 %v566, 0.7978846
  %v571 = vmul.f32 %v567, 0.7978846
  %v572 = vtanh.pop %v568
  %v573 = vtanh.pop %v569
  %v574 = vtanh.pop %v570
  %v575 = vtanh.pop %v571
  %v576 = vadd.f32 %v572, 1.0
  %v577 = vadd.f32 %v573, 1.0
  %v578 = vadd.f32 %v574, 1.0
  %v579 = vadd.f32 %v575, 1.0
  %v580 = vmul.f32 %v576, 0.5
  %v581 = vmul.f32 %v577, 0.5
  %v582 = vmul.f32 %v578, 0.5
  %v583 = vmul.f32 %v579, 0.5
  %v584 = vmul.f32 %v543, %v580
  %v585 = vmul.f32 %v545, %v581
  %v586 = vmul.f32 %v548, %v582
  %v587 = vmul.f32 %v550, %v583
  %v588 = vpack.c.bf16 %v585, %v584
  %v589 = vpack.c.bf16 %v587, %v586
  %v590 = vld [vmem:[%s7] sm:$0xf]
  %v591 = vld [vmem:[%s7 + $0x4] sm:$0xf]
  %v592 = vld [vmem:[%s7 + $0x8] sm:$0xf]
  %v593 = vld [vmem:[%s7 + $0xc] sm:$0xf]
  %v594 = vld [vmem:[%s7 + $0x10] sm:$0xf]
  %v595 = vld [vmem:[%s7 + $0x14] sm:$0xf]
  %v596 = vld [vmem:[%s7 + $0x18] sm:$0xf]
  %v597 = vld [vmem:[%s7 + $0x1c] sm:$0xf]
  %v598 = vld [vmem:[%s7 + $0x20] sm:$0xf]
  %v599 = vld [vmem:[%s7 + $0x24] sm:$0xf]
  %v600 = vld [vmem:[%s7 + $0x28] sm:$0xf]
  %v601 = vld [vmem:[%s7 + $0x2c] sm:$0xf]
  %v602 = vld [vmem:[%s7 + $0x30] sm:$0xf]
  %v603 = vld [vmem:[%s7 + $0x34] sm:$0xf]
  %v604 = vld [vmem:[%s7 + $0x38] sm:$0xf]
  %v605 = vld [vmem:[%s7 + $0x3c] sm:$0xf]
  %v622 = vunpack.c.l.b16 %v590
  %v623 = vunpack.c.l.b16 %v591
  %v624 = vunpack.c.l.b16 %v592
  %v625 = vunpack.c.l.b16 %v593
  %v626 = vunpack.c.l.b16 %v594
  %v627 = vunpack.c.l.b16 %v595
  %v628 = vunpack.c.l.b16 %v596
  %v629 = vunpack.c.l.b16 %v597
  %v630 = vunpack.c.l.b16 %v598
  %v631 = vunpack.c.l.b16 %v599
  %v632 = vunpack.c.l.b16 %v600
  %v633 = vunpack.c.l.b16 %v601
  %v634 = vunpack.c.l.b16 %v602
  %v635 = vunpack.c.l.b16 %v603
  %v636 = vunpack.c.l.b16 %v604
  %v637 = vunpack.c.l.b16 %v605
  %v638 = vpack.c.b16 %v623, %v622
  %v639 = vpack.c.b16 %v625, %v624
  %v640 = vpack.c.b16 %v627, %v626
  %v641 = vpack.c.b16 %v629, %v628
  %v642 = vpack.c.b16 %v631, %v630
  %v643 = vpack.c.b16 %v633, %v632
  %v644 = vpack.c.b16 %v635, %v634
  %v645 = vpack.c.b16 %v637, %v636
  %654 = vmatpush.bf16.msra.mxu0 %v645
  %655 = vmatpush.bf16.msra.mxu0 %v644
  %656 = vmatpush.bf16.msra.mxu0 %v643
  %657 = vmatpush.bf16.msra.mxu0 %v642
  %658 = vmatpush.bf16.msra.mxu0 %v641
  %659 = vmatpush.bf16.msra.mxu0 %v640
  %660 = vmatpush.bf16.msra.mxu0 %v639
  %661 = vmatpush.bf16.msra.mxu0 %v638
  %662 = vmatmul.bf16.gmra.mxu0 %v588
  %v663 = vpop.f32.mrf.mxu0
  %v664 = vadd.f32 0.0, %v663
  %v665 = vpop.f32.mrf.mxu0
  %v666 = vadd.f32 0.0, %v665
  %667 = vmatmul.bf16.gmra.mxu0 %v589
  %v668 = vpop.f32.mrf.mxu0
  %v669 = vadd.f32 0.0, %v668
  %v670 = vpop.f32.mrf.mxu0
  %v671 = vadd.f32 0.0, %v670
  %672 = vdwg.mxu0
  %v673 = vadd.f32 %v417, %v664
  %v674 = vadd.f32 %v418, %v666
  %v675 = vadd.f32 %v419, %v669
  %v676 = vadd.f32 %v420, %v671
  %677 = vst.msk [vmem:[%s8] sm:$0xff] %vm38, %v673
  %678 = vst.msk [vmem:[%s8 + $0x8] sm:$0xff] %vm38, %v674
  %679 = vst.msk [vmem:[%s8 + $0x10] sm:$0xff] %vm38, %v675
  %680 = vst.msk [vmem:[%s8 + $0x18] sm:$0x3] %vm48, %v676
  // Predicated region
  $region34: #{policy_forward.2} parent=0 // pred_check
    _
  $region35: #{policy_forward.2} parent=0 // pred_check_branch
    %682 = sbr.rel (0) target = $region37
  $region36: #{policy_forward.2} parent=0 // pred_region
    _
  $region37: #{policy_forward.2} parent=0 // pred_fallthru
    _
  // Predicated region
  $region38: #{policy_forward.2} parent=0 // pred_check
    _
  $region39: #{policy_forward.2} parent=0 // pred_check_branch
    %684 = sbr.rel (0) target = $region41
  $region40: #{policy_forward.2} parent=0 // pred_region
    _
  $region41: #{policy_forward.2} parent=0 // pred_fallthru
    _

</llo_original>
